<compile_context>
chip_gen: v6e
topology: v6e:2x2x1
jax: 0.10.0
libtpu: 0.0.40
codegen_flags: <defaults>
</compile_context>

<pallas_src>
import functools
import numpy as np

import jax
import jax.numpy as jnp
from jax.experimental import pallas as pl
from jax.experimental.pallas import tpu as pltpu

_VMEM_LIMIT = 32 * 1024 * 1024
_TM_CAP, _TN_CAP, _TK_CAP = 256, 256, 512


def _round_up(x, m):
    return (x + m - 1) // m * m


# ----------------------------------------------------------------------------
# Tile selection (review fix: 128/256 floors, pad small amounts instead of tiny divisors)
# ----------------------------------------------------------------------------
def _pick_tile_m(M):
    if M <= _TM_CAP:
        return M, M                          # full dim is always a legal block
    for t in (256, 128):
        if M % t == 0:
            return t, M
    return 256, _round_up(M, 256)             # pad (<8% at realistic sizes) instead of tm=16/32


def _pick_tile_n(N):
    if N <= _TN_CAP:
        return N, N
    for t in (256, 128):
        if N % t == 0:
            return t, N
    return 128, _round_up(N, 128)              # lane-dense (unmasked) output stores


def _pick_tile_k(K):
    if K < 8:
        return 8, 8                            # keep the reduction at least one sublane deep
    if K <= _TK_CAP:
        return K, K                            # single K step -> accumulator-free kernel
    for t in (512, 384, 256, 128):
        if K % t == 0:
            return t, K
    return 512, _round_up(K, 512)


# ----------------------------------------------------------------------------
# Pallas kernels
# ----------------------------------------------------------------------------
def _make_mm_kernel(relu, has_bias, has_res, single_k):
    """Matmul kernel with optional bias / residual / ReLU epilogue.

    single_k=True : one K step, no f32 scratch, direct dot -> epilogue -> store.
    single_k=False: K-tiled; first step writes the accumulator, last step fuses the
                    final dot with the epilogue (no extra accumulator RMW pass).
    """
    if single_k:
        def kernel(*refs):
            a_ref, b_ref = refs[0], refs[1]
            idx = 2
            bias_ref = res_ref = None
            if has_bias:
                bias_ref = refs[idx]; idx += 1
            if has_res:
                res_ref = refs[idx]; idx += 1
            o_ref = refs[idx]
            r = jnp.dot(a_ref[...], b_ref[...], preferred_element_type=jnp.float32)
            if has_bias:
                r = r + bias_ref[...]
            if has_res:
                r = r + res_ref[...].astype(jnp.float32)
            if relu:
                r = jnp.maximum(r, 0.0)
            o_ref[...] = r.astype(o_ref.dtype)
        return kernel

    def kernel(*refs):
        a_ref, b_ref = refs[0], refs[1]
        idx = 2
        bias_ref = res_ref = None
        if has_bias:
            bias_ref = refs[idx]; idx += 1
        if has_res:
            res_ref = refs[idx]; idx += 1
        o_ref, acc_ref = refs[idx], refs[idx + 1]

        k = pl.program_id(2)
        nk = pl.num_programs(2)
        d = jnp.dot(a_ref[...], b_ref[...], preferred_element_type=jnp.float32)

        @pl.when(k == 0)
        def _():
            acc_ref[...] = d                    # no zero-init pass

        @pl.when(jnp.logical_and(k > 0, k < nk - 1))
        def _():
            acc_ref[...] += d

        @pl.when(k == nk - 1)
        def _():
            r = acc_ref[...] + d                # fuse last dot with the epilogue
            if has_bias:
                r = r + bias_ref[...]
            if has_res:
                r = r + res_ref[...].astype(jnp.float32)
            if relu:
                r = jnp.maximum(r, 0.0)
            o_ref[...] = r.astype(o_ref.dtype)

    return kernel


def _conv3x3_kernel(x_ref, w_ref, b_ref, o_ref, acc_ref, *, H, Wp, relu):
    """Fused 3x3 / stride-1 / pad-1 conv (+folded BN +ReLU), O-tiled.

    x_ref holds one zero-padded image, row-flattened to (1, Hp*Wp, Cin); each tap (di,dj) is a
    statically shifted (R, Cin) window, so the conv is 9 MXU matmuls with no im2col in HBM.
    Taps are grouped per input row (3 groups of 3) so the (R, tO) f32 scratch sees only
    2 stores + 1 load.  Output rows are in (H, Wp) padded-width layout; the host drops the
    two junk columns per row.
    """
    R = H * Wp

    def row_taps(di):
        s = None
        for dj in range(3):
            off = di * Wp + dj
            a = x_ref[0, off:off + R, :]                      # (R, Cin) bf16
            d = jnp.dot(a, w_ref[di * 3 + dj],
                        preferred_element_type=jnp.float32)
            s = d if s is None else s + d
        return s

    acc_ref[...] = row_taps(0)                                # direct write, no zero-init
    acc_ref[...] += row_taps(1)
    r = acc_ref[...] + row_taps(2) + b_ref[...]
    if relu:
        r = jnp.maximum(r, 0.0)
    o_ref[0] = r.astype(o_ref.dtype)


def _maxpool_kernel(ee_ref, eo_ref, oe_ref, oo_ref, o_ref, *, oh, ow):
    """3x3 / stride-2 / pad-1 max-pool from the four (row, col) parity phases of the padded map."""
    m = ee_ref[0, :oh, :ow, :]
    m = jnp.maximum(m, ee_ref[0, :oh, 1:ow + 1, :])
    m = jnp.maximum(m, ee_ref[0, 1:oh + 1, :ow, :])
    m = jnp.maximum(m, ee_ref[0, 1:oh + 1, 1:ow + 1, :])
    m = jnp.maximum(m, eo_ref[0, :oh, :ow, :])
    m = jnp.maximum(m, eo_ref[0, 1:oh + 1, :ow, :])
    m = jnp.maximum(m, oe_ref[0, :oh, :ow, :])
    m = jnp.maximum(m, oe_ref[0, :oh, 1:ow + 1, :])
    m = jnp.maximum(m, oo_ref[0, :oh, :ow, :])
    o_ref[0] = m


# ----------------------------------------------------------------------------
# Cached pallas_call builders (one Mosaic compile per unique shape / flag set)
# ----------------------------------------------------------------------------
@functools.lru_cache(maxsize=None)
def _get_matmul(Mp, Kp, Np, tm, tk, tn, relu, has_bias, has_res, out_dtype):
    nk = Kp // tk
    single_k = (nk == 1)
    kernel = _make_mm_kernel(relu, has_bias, has_res, single_k)

    if single_k:
        grid = (Mp // tm, Np // tn)
        in_specs = [
            pl.BlockSpec((tm, tk), lambda i, j: (i, 0)),
            pl.BlockSpec((tk, tn), lambda i, j: (0, j)),
        ]
        if has_bias:
            in_specs.append(pl.BlockSpec((1, tn), lambda i, j: (0, j)))
        if has_res:
            in_specs.append(pl.BlockSpec((tm, tn), lambda i, j: (i, j)))
        out_spec = pl.BlockSpec((tm, tn), lambda i, j: (i, j))
        scratch = []
        dims = ("parallel", "parallel")
    else:
        grid = (Mp // tm, Np // tn, nk)
        in_specs = [
            pl.BlockSpec((tm, tk), lambda i, j, k: (i, k)),
            pl.BlockSpec((tk, tn), lambda i, j, k: (k, j)),
        ]
        if has_bias:
            in_specs.append(pl.BlockSpec((1, tn), lambda i, j, k: (0, j)))
        if has_res:
            in_specs.append(pl.BlockSpec((tm, tn), lambda i, j, k: (i, j)))
        out_spec = pl.BlockSpec((tm, tn), lambda i, j, k: (i, j))
        scratch = [pltpu.VMEM((tm, tn), jnp.float32)]
        dims = ("parallel", "parallel", "arbitrary")

    return pl.pallas_call(
        kernel,
        out_shape=jax.ShapeDtypeStruct((Mp, Np), out_dtype),
        grid_spec=pltpu.PrefetchScalarGridSpec(
            num_scalar_prefetch=0,
            grid=grid,
            in_specs=in_specs,
            out_specs=out_spec,
            scratch_shapes=scratch,
        ),
        compiler_params=pltpu.CompilerParams(
            dimension_semantics=dims,
            vmem_limit_bytes=_VMEM_LIMIT,
        ),
    )


@functools.lru_cache(maxsize=None)
def _get_conv3x3(N, H, W, C, O, relu):
    Wp, Hp = W + 2, H + 3
    R = H * Wp
    tO = O if O <= 256 else 256
    assert O % tO == 0
    kernel = functools.partial(_conv3x3_kernel, H=H, Wp=Wp, relu=relu)
    return pl.pallas_call(
        kernel,
        out_shape=jax.ShapeDtypeStruct((N, R, O), jnp.bfloat16),
        grid_spec=pltpu.PrefetchScalarGridSpec(
            num_scalar_prefetch=0,
            grid=(N, O // tO),
            in_specs=[
                pl.BlockSpec((1, Hp * Wp, C), lambda n, o: (n, 0, 0)),   # DMA'd once per n
                pl.BlockSpec((9, C, tO), lambda n, o: (0, 0, o)),
                pl.BlockSpec((1, tO), lambda n, o: (0, o)),
            ],
            out_specs=pl.BlockSpec((1, R, tO), lambda n, o: (n, 0, o)),
            scratch_shapes=[pltpu.VMEM((R, tO), jnp.float32)],
        ),
        compiler_params=pltpu.CompilerParams(
            dimension_semantics=("parallel", "parallel"),
            vmem_limit_bytes=_VMEM_LIMIT,
        ),
    )


@functools.lru_cache(maxsize=None)
def _get_maxpool(N, oh, ow, C):
    kernel = functools.partial(_maxpool_kernel, oh=oh, ow=ow)
    phase_spec = pl.BlockSpec((1, oh + 1, ow + 1, C), lambda n: (n, 0, 0, 0))
    return pl.pallas_call(
        kernel,
        out_shape=jax.ShapeDtypeStruct((N, oh, ow, C), jnp.bfloat16),
        grid=(N,),
        in_specs=[phase_spec, phase_spec, phase_spec, phase_spec],
        out_specs=pl.BlockSpec((1, oh, ow, C), lambda n: (n, 0, 0, 0)),
        compiler_params=pltpu.CompilerParams(
            dimension_semantics=("parallel",),
            vmem_limit_bytes=_VMEM_LIMIT,
        ),
    )


# ----------------------------------------------------------------------------
# Matmul wrapper
# ----------------------------------------------------------------------------
def matmul_fused(a, b, bias=None, residual=None, relu=False, out_dtype=jnp.bfloat16):
    """a:(M,K) @ b:(K,N) [+ bias] [+ residual] [+ ReLU] on the MXU, bf16 operands, f32 acc."""
    M, K = a.shape
    N = b.shape[1]
    tm, Mp = _pick_tile_m(M)
    tk, Kp = _pick_tile_k(K)
    tn, Np = _pick_tile_n(N)

    if (Mp, Kp) != (M, K):
        a = jnp.pad(a, ((0, Mp - M), (0, Kp - K)))
    if (Kp, Np) != (K, N):
        b = jnp.pad(b, ((0, Kp - K), (0, Np - N)))

    args = [a, b]
    has_bias = bias is not None
    has_res = residual is not None
    if has_bias:
        bb = bias.reshape(1, N).astype(jnp.float32)
        if Np != N:
            bb = jnp.pad(bb, ((0, 0), (0, Np - N)))
        args.append(bb)
    if has_res:
        rr = residual
        if (Mp, Np) != (M, N):
            rr = jnp.pad(rr, ((0, Mp - M), (0, Np - N)))
        args.append(rr)

    out = _get_matmul(Mp, Kp, Np, tm, tk, tn, bool(relu), has_bias, has_res, out_dtype)(*args)
    if (Mp, Np) != (M, N):
        out = out[:M, :N]
    return out


# ----------------------------------------------------------------------------
# NHWC conv / pool ops
# ----------------------------------------------------------------------------
def im2col(x, kh, kw, stride, pad):
    """NHWC -> (N*oh*ow, round_up(kh*kw*C, 16)). Used for the 7x7 stem and the 3 stride-2 convs."""
    N, H, W, C = x.shape
    if pad:
        x = jnp.pad(x, ((0, 0), (pad, pad), (pad, pad), (0, 0)))
    Hp, Wp = H + 2 * pad, W + 2 * pad
    oh = (Hp - kh) // stride + 1
    ow = (Wp - kw) // stride + 1
    cols = []
    for i in range(kh):
        for j in range(kw):
            cols.append(x[:, i:i + stride * (oh - 1) + 1:stride,
                             j:j + stride * (ow - 1) + 1:stride, :])
    K = kh * kw * C
    Kp = _round_up(K, 16)
    if Kp != K:                                  # bf16 sublane packing (stem K=147 -> 160)
        cols.append(jnp.zeros((N, oh, ow, Kp - K), x.dtype))
    patches = jnp.concatenate(cols, axis=-1)
    return patches.reshape(N * oh * ow, Kp), oh, ow


def conv_im2col(x, p, kh, kw, stride, pad, relu):
    N = x.shape[0]
    O = p["w"].shape[-1]
    patches, oh, ow = im2col(x, kh, kw, stride, pad)
    y = matmul_fused(patches, p["w"], bias=p["b"], relu=relu)
    return y.reshape(N, oh, ow, O)


def conv1x1(x, p, relu, residual=None, stride=1):
    """1x1 conv (+folded BN) as a plain matmul; optional fused residual add + ReLU epilogue."""
    if stride > 1:
        x = x[:, ::stride, ::stride, :]
    N, H, W, C = x.shape
    O = p["w"].shape[-1]
    a = x.reshape(N * H * W, C)
    res = residual.reshape(N * H * W, O) if residual is not None else None
    y = matmul_fused(a, p["w"], bias=p["b"], relu=relu, residual=res)
    return y.reshape(N, H, W, O)


def conv3x3_s1(x, p, relu=True):
    """3x3 / stride-1 / pad-1 conv via the fused tap-accumulating Pallas kernel (no im2col)."""
    N, H, W, C = x.shape
    O = p["w"].shape[-1]
    Wp, Hp = W + 2, H + 3                          # pad: top 1 / bottom 2 / left 1 / right 1
    xp = jnp.pad(x, ((0, 0), (1, 2), (1, 1), (0, 0)))
    xf = xp.reshape(N, Hp * Wp, C)
    out = _get_conv3x3(N, H, W, C, O, bool(relu))(xf, p["w"], p["b"].reshape(1, O))
    return out.reshape(N, H, Wp, O)[:, :, :W, :]   # drop the 2 junk columns per row


def maxpool_3x3_s2(x):
    """MaxPool2d(kernel=3, stride=2, padding=1) on NHWC (H, W even)."""
    N, H, W, C = x.shape
    assert H % 2 == 0 and W % 2 == 0
    oh, ow = H // 2, W // 2
    xp = jnp.pad(x, ((0, 0), (1, 1), (1, 1), (0, 0)), constant_values=-jnp.inf)
    ee = xp[:, 0::2, 0::2, :]
    eo = xp[:, 0::2, 1::2, :]
    oe = xp[:, 1::2, 0::2, :]
    oo = xp[:, 1::2, 1::2, :]
    return _get_maxpool(N, oh, ow, C)(ee, eo, oe, oo)


def _pool_matrix(in_size, out_size):
    """Exact PyTorch AdaptiveAvgPool2d bin matrix (out_size, in_size)."""
    P = np.zeros((out_size, in_size), np.float32)
    for i in range(out_size):
        s = (i * in_size) // out_size
        e = -((-(i + 1) * in_size) // out_size)    # ceil((i+1)*in/out)
        P[i, s:e] = 1.0 / (e - s)
    return jnp.asarray(P, jnp.bfloat16)


def adaptive_avg_pool(x, out_size):
    """AdaptiveAvgPool2d((out_size, out_size)) via two small Pallas matmuls."""
    N, H, W, C = x.shape
    Ph = _pool_matrix(H, out_size)
    Pw = _pool_matrix(W, out_size)
    xh = jnp.transpose(x, (1, 0, 2, 3)).reshape(H, N * W * C)
    y = matmul_fused(Ph, xh)                                        # (out, N*W*C) bf16
    y = y.reshape(out_size, N, W, C).transpose(1, 0, 2, 3)
    xw = jnp.transpose(y, (2, 0, 1, 3)).reshape(W, N * out_size * C)
    z = matmul_fused(Pw, xw, out_dtype=jnp.float32)                 # final output in f32
    return z.reshape(out_size, N, out_size, C).transpose(1, 2, 0, 3)


# ----------------------------------------------------------------------------
# Jitted stages (shared compiles across the 33 bottleneck blocks)
# ----------------------------------------------------------------------------
def _bottleneck_impl(x, blk, *, stride):
    out = conv1x1(x, blk["conv1"], relu=True)
    if stride == 1:
        out = conv3x3_s1(out, blk["conv2"], relu=True)
    else:
        out = conv_im2col(out, blk["conv2"], 3, 3, stride, 1, relu=True)
    identity = conv1x1(x, blk["down"], relu=False, stride=stride) if "down" in blk else x
    # conv3 + folded BN + residual add + ReLU fused in one matmul epilogue
    return conv1x1(out, blk["conv3"], relu=True, residual=identity)


_bottleneck = jax.jit(_bottleneck_impl, static_argnames=("stride",))


def _stem_impl(images, p):
    x = jnp.transpose(images, (0, 2, 3, 1)).astype(jnp.bfloat16)    # NCHW -> NHWC, bf16
    x = conv_im2col(x, p, 7, 7, 2, 3, relu=True)                    # 7x7 / stride 2
    return maxpool_3x3_s2(x)                                        # 3x3 / stride 2


_stem = jax.jit(_stem_impl)
_pool = jax.jit(adaptive_avg_pool, static_argnames=("out_size",))


# ----------------------------------------------------------------------------
# Deterministic parameter construction (ResNet-101 shapes) + one-time folding
# ----------------------------------------------------------------------------
class _KeyGen:
    def __init__(self, seed=0):
        self._key = jax.random.PRNGKey(seed)

    def next(self):
        self._key, k = jax.random.split(self._key)
        return k


def _make_conv_bn(gen, cout, cin, kh, kw):
    fan_in = cin * kh * kw
    w = jax.random.normal(gen.next(), (cout, cin, kh, kw), jnp.float32) * np.sqrt(2.0 / fan_in)
    gamma = 1.0 + 0.1 * jax.random.normal(gen.next(), (cout,), jnp.float32)
    beta = 0.05 * jax.random.normal(gen.next(), (cout,), jnp.float32)
    mean = 0.05 * jax.random.normal(gen.next(), (cout,), jnp.float32)
    var = 0.9 + 0.2 * jax.random.uniform(gen.next(), (cout,), jnp.float32)
    return dict(w=w, gamma=gamma, beta=beta, mean=mean, var=var)


def _make_bottleneck(gen, inplanes, planes, stride, downsample):
    blk = dict(
        conv1=_make_conv_bn(gen, planes, inplanes, 1, 1),
        conv2=_make_conv_bn(gen, planes, planes, 3, 3),
        conv3=_make_conv_bn(gen, planes * 4, planes, 1, 1),
        stride=stride,
    )
    if downsample:
        blk["down"] = _make_conv_bn(gen, planes * 4, inplanes, 1, 1)
    return blk


def make_encoder_params(seed=0):
    gen = _KeyGen(seed)
    params = dict(conv1=_make_conv_bn(gen, 64, 3, 7, 7))
    layers = []
    inplanes = 64
    # ResNet-101: Bottleneck blocks [3, 4, 23, 3]
    for planes, nblocks, stride in [(64, 3, 1), (128, 4, 2), (256, 23, 2), (512, 3, 2)]:
        blocks = []
        for b in range(nblocks):
            s = stride if b == 0 else 1
            blocks.append(_make_bottleneck(gen, inplanes, planes, s, downsample=(b == 0)))
            inplanes = planes * 4
        layers.append(blocks)
    params["layers"] = layers
    return params


def prepare_params(params):
    """Fold eval-mode BN into the conv, cast operands to bf16, pre-lay-out weights once."""
    def fold(p):
        scale = p["gamma"] / jnp.sqrt(p["var"] + 1e-5)
        bias = p["beta"] - scale * p["mean"]
        w = p["w"] * scale[:, None, None, None]          # (O, I, KH, KW) OIHW
        return w, bias.astype(jnp.float32)

    def as_matmul(p):                                    # -> (round_up(KH*KW*I,16), O) bf16
        w, b = fold(p)
        O, I, KH, KW = w.shape
        K = KH * KW * I
        wm = jnp.transpose(w, (2, 3, 1, 0)).reshape(K, O)
        Kp = _round_up(K, 16)
        if Kp != K:                                      # matches im2col's zero chunk
            wm = jnp.pad(wm, ((0, Kp - K), (0, 0)))
        return {"w": wm.astype(jnp.bfloat16), "b": b}

    def as_tap9(p):                                      # -> (9, I, O) bf16 (tap-major)
        w, b = fold(p)
        O, I, _, _ = w.shape
        w9 = jnp.transpose(w, (2, 3, 1, 0)).reshape(9, I, O).astype(jnp.bfloat16)
        return {"w": w9, "b": b}

    fp = {"conv1": as_matmul(params["conv1"])}
    layers = []
    for li, layer in enumerate(params["layers"]):
        blocks = []
        for bi, blk in enumerate(layer):
            stride = 2 if (li > 0 and bi == 0) else 1
            nb = {"conv1": as_matmul(blk["conv1"]), "conv3": as_matmul(blk["conv3"])}
            nb["conv2"] = as_tap9(blk["conv2"]) if stride == 1 else as_matmul(blk["conv2"])
            if "down" in blk:
                nb["down"] = as_matmul(blk["down"])
            blocks.append(nb)
        layers.append(blocks)
    fp["layers"] = layers
    return fp


# ----------------------------------------------------------------------------
# Encoder forward (== backbone(images) -> adaptive_pool -> permute(0, 2, 3, 1))
# ----------------------------------------------------------------------------
def encoder_forward(fp, images_nchw, encoded_image_size=14):
    x = _stem(images_nchw, fp["conv1"])
    for li, layer in enumerate(fp["layers"]):
        for bi, blk in enumerate(layer):
            stride = 2 if (li > 0 and bi == 0) else 1
            x = _bottleneck(x, blk, stride=stride)
    return _pool(x, out_size=encoded_image_size)         # (N, 14, 14, 2048) f32


if __name__ == "__main__":
    key = jax.random.PRNGKey(0)
    # Small input consistent with the module: (batch, 3, image_size, image_size)
    images = jax.random.normal(key, (2, 3, 64, 64), jnp.float32)

    raw_params = make_encoder_params(seed=0)
    fast_params = prepare_params(raw_params)

    out = encoder_forward(fast_params, images)
    out = jax.block_until_ready(out)

    assert out.shape == (2, 14, 14, 2048), out.shape
    assert out.dtype == jnp.float32
    assert bool(jnp.all(jnp.isfinite(out)))
    print("KERNEL_OK")
</pallas_src>

<mosaic_0001>
module attributes {stable_mosaic.version = 11 : i64} {
  func.func @kernel(%arg0: i32, %arg1: i32, %arg2: memref<256x160xbf16, #tpu.memory_space<vmem>>, %arg3: memref<160x64xbf16, #tpu.memory_space<vmem>>, %arg4: memref<1x64xf32, #tpu.memory_space<vmem>>, %arg5: memref<256x64xbf16, #tpu.memory_space<vmem>>) attributes {dimension_semantics = [#tpu.dimension_semantics<parallel>, #tpu.dimension_semantics<parallel>], iteration_bounds = array<i64: 8, 1>, scalar_prefetch = 0 : i64, scratch_operands = 0 : i64, tpu.core_type = #tpu.core_type<tc>, window_params = [{transform_indices = @transform_0, window_bounds = array<i64: 256, 160>}, {transform_indices = @transform_1, window_bounds = array<i64: 160, 64>}, {transform_indices = @transform_2, window_bounds = array<i64: 1, 64>}, {transform_indices = @transform_3, window_bounds = array<i64: 256, 64>}]} {
    %c0 = arith.constant 0 : index
    %c0_0 = arith.constant 0 : index
    %0 = vector.load %arg2[%c0, %c0_0] : memref<256x160xbf16, #tpu.memory_space<vmem>>, vector<256x160xbf16>
    %c0_1 = arith.constant 0 : index
    %c0_2 = arith.constant 0 : index
    %1 = vector.load %arg3[%c0_1, %c0_2] : memref<160x64xbf16, #tpu.memory_space<vmem>>, vector<160x64xbf16>
    %cst = arith.constant dense<0.000000e+00> : vector<256x64xf32>
    %2 = tpu.matmul %0, %1, %cst {dimension_numbers = #tpu.dot_dimension_numbers<[1], [0], [0], [1], [0, 0, 1, 1], [], []>} : vector<256x160xbf16>, vector<160x64xbf16>, vector<256x64xf32> -> vector<256x64xf32>
    %c0_3 = arith.constant 0 : index
    %c0_4 = arith.constant 0 : index
    %3 = vector.load %arg4[%c0_3, %c0_4] : memref<1x64xf32, #tpu.memory_space<vmem>>, vector<1x64xf32>
    %4 = vector.broadcast %3 : vector<1x64xf32> to vector<256x64xf32>
    %5 = arith.addf %2, %4 : vector<256x64xf32>
    %cst_5 = arith.constant 0.000000e+00 : f32
    %6 = vector.broadcast %cst_5 : f32 to vector<256x64xf32>
    %7 = arith.maximumf %5, %6 : vector<256x64xf32>
    %8 = arith.truncf %7 : vector<256x64xf32> to vector<256x64xbf16>
    %c0_6 = arith.constant 0 : index
    %c0_7 = arith.constant 0 : index
    %9 = vector.load %arg5[%c0_6, %c0_7] : memref<256x64xbf16, #tpu.memory_space<vmem>>, vector<256x64xbf16>
    tpu.vector_store %arg5[%c0_6, %c0_7], %8 {strides = array<i32>} : memref<256x64xbf16, #tpu.memory_space<vmem>>, vector<256x64xbf16>,
    return
  }
  func.func @transform_0(%arg0: i32, %arg1: i32) -> (i32, i32) {
    %c0_i32 = arith.constant 0 : i32
    %c0_i32_0 = arith.constant 0 : i32
    return %arg0, %c0_i32 : i32, i32
  }
  func.func @transform_1(%arg0: i32, %arg1: i32) -> (i32, i32) {
    %c0_i32 = arith.constant 0 : i32
    %c0_i32_0 = arith.constant 0 : i32
    return %c0_i32, %arg1 : i32, i32
  }
  func.func @transform_2(%arg0: i32, %arg1: i32) -> (i32, i32) {
    %c0_i32 = arith.constant 0 : i32
    %c0_i32_0 = arith.constant 0 : i32
    return %c0_i32, %arg1 : i32, i32
  }
  func.func @transform_3(%arg0: i32, %arg1: i32) -> (i32, i32) {
    %c0_i32 = arith.constant 0 : i32
    return %arg0, %arg1 : i32, i32
  }
}

module attributes {stable_mosaic.version = 11 : i64} {
  func.func @_maxpool_kernel(%arg0: i32, %arg1: memref<1x17x17x64xbf16, #tpu.memory_space<vmem>>, %arg2: memref<1x17x17x64xbf16, #tpu.memory_space<vmem>>, %arg3: memref<1x17x17x64xbf16, #tpu.memory_space<vmem>>, %arg4: memref<1x17x17x64xbf16, #tpu.memory_space<vmem>>, %arg5: memref<1x16x16x64xbf16, #tpu.memory_space<vmem>>) attributes {dimension_semantics = [#tpu.dimension_semantics<parallel>], iteration_bounds = array<i64: 2>, scalar_prefetch = 0 : i64, scratch_operands = 0 : i64, tpu.core_type = #tpu.core_type<tc>, window_params = [{transform_indices = @transform_0, window_bounds = array<i64: 1, 17, 17, 64>}, {transform_indices = @transform_1, window_bounds = array<i64: 1, 17, 17, 64>}, {transform_indices = @transform_2, window_bounds = array<i64: 1, 17, 17, 64>}, {transform_indices = @transform_3, window_bounds = array<i64: 1, 17, 17, 64>}, {transform_indices = @transform_4, window_bounds = array<i64: 1, 16, 16, 64>}]} {
    %c0 = arith.constant 0 : index
    %c0_0 = arith.constant 0 : index
    %c0_1 = arith.constant 0 : index
    %c0_2 = arith.constant 0 : index
    %0 = vector.load %arg1[%c0, %c0_0, %c0_1, %c0_2] : memref<1x17x17x64xbf16, #tpu.memory_space<vmem>>, vector<1x16x16x64xbf16>
    %1 = vector.shape_cast %0 : vector<1x16x16x64xbf16> to vector<16x16x64xbf16>
    %c0_3 = arith.constant 0 : index
    %c0_4 = arith.constant 0 : index
    %c1 = arith.constant 1 : index
    %c0_5 = arith.constant 0 : index
    %2 = vector.load %arg1[%c0_3, %c0_4, %c1, %c0_5] : memref<1x17x17x64xbf16, #tpu.memory_space<vmem>>, vector<1x16x16x64xbf16>
    %3 = vector.shape_cast %2 : vector<1x16x16x64xbf16> to vector<16x16x64xbf16>
    %4 = arith.maximumf %1, %3 : vector<16x16x64xbf16>
    %c0_6 = arith.constant 0 : index
    %c1_7 = arith.constant 1 : index
    %c0_8 = arith.constant 0 : index
    %c0_9 = arith.constant 0 : index
    %5 = vector.load %arg1[%c0_6, %c1_7, %c0_8, %c0_9] : memref<1x17x17x64xbf16, #tpu.memory_space<vmem>>, vector<1x16x16x64xbf16>
    %6 = vector.shape_cast %5 : vector<1x16x16x64xbf16> to vector<16x16x64xbf16>
    %7 = arith.maximumf %4, %6 : vector<16x16x64xbf16>
    %c0_10 = arith.constant 0 : index
    %c1_11 = arith.constant 1 : index
    %c1_12 = arith.constant 1 : index
    %c0_13 = arith.constant 0 : index
    %8 = vector.load %arg1[%c0_10, %c1_11, %c1_12, %c0_13] : memref<1x17x17x64xbf16, #tpu.memory_space<vmem>>, vector<1x16x16x64xbf16>
    %9 = vector.shape_cast %8 : vector<1x16x16x64xbf16> to vector<16x16x64xbf16>
    %10 = arith.maximumf %7, %9 : vector<16x16x64xbf16>
    %c0_14 = arith.constant 0 : index
    %c0_15 = arith.constant 0 : index
    %c0_16 = arith.constant 0 : index
    %c0_17 = arith.constant 0 : index
    %11 = vector.load %arg2[%c0_14, %c0_15, %c0_16, %c0_17] : memref<1x17x17x64xbf16, #tpu.memory_space<vmem>>, vector<1x16x16x64xbf16>
    %12 = vector.shape_cast %11 : vector<1x16x16x64xbf16> to vector<16x16x64xbf16>
    %13 = arith.maximumf %10, %12 : vector<16x16x64xbf16>
    %c0_18 = arith.constant 0 : index
    %c1_19 = arith.constant 1 : index
    %c0_20 = arith.constant 0 : index
    %c0_21 = arith.constant 0 : index
    %14 = vector.load %arg2[%c0_18, %c1_19, %c0_20, %c0_21] : memref<1x17x17x64xbf16, #tpu.memory_space<vmem>>, vector<1x16x16x64xbf16>
    %15 = vector.shape_cast %14 : vector<1x16x16x64xbf16> to vector<16x16x64xbf16>
    %16 = arith.maximumf %13, %15 : vector<16x16x64xbf16>
    %c0_22 = arith.constant 0 : index
    %c0_23 = arith.constant 0 : index
    %c0_24 = arith.constant 0 : index
    %c0_25 = arith.constant 0 : index
    %17 = vector.load %arg3[%c0_22, %c0_23, %c0_24, %c0_25] : memref<1x17x17x64xbf16, #tpu.memory_space<vmem>>, vector<1x16x16x64xbf16>
    %18 = vector.shape_cast %17 : vector<1x16x16x64xbf16> to vector<16x16x64xbf16>
    %19 = arith.maximumf %16, %18 : vector<16x16x64xbf16>
    %c0_26 = arith.constant 0 : index
    %c0_27 = arith.constant 0 : index
    %c1_28 = arith.constant 1 : index
    %c0_29 = arith.constant 0 : index
    %20 = vector.load %arg3[%c0_26, %c0_27, %c1_28, %c0_29] : memref<1x17x17x64xbf16, #tpu.memory_space<vmem>>, vector<1x16x16x64xbf16>
    %21 = vector.shape_cast %20 : vector<1x16x16x64xbf16> to vector<16x16x64xbf16>
    %22 = arith.maximumf %19, %21 : vector<16x16x64xbf16>
    %c0_30 = arith.constant 0 : index
    %c0_31 = arith.constant 0 : index
    %c0_32 = arith.constant 0 : index
    %c0_33 = arith.constant 0 : index
    %23 = vector.load %arg4[%c0_30, %c0_31, %c0_32, %c0_33] : memref<1x17x17x64xbf16, #tpu.memory_space<vmem>>, vector<1x16x16x64xbf16>
    %24 = vector.shape_cast %23 : vector<1x16x16x64xbf16> to vector<16x16x64xbf16>
    %25 = arith.maximumf %22, %24 : vector<16x16x64xbf16>
    %c0_34 = arith.constant 0 : index
    %c0_35 = arith.constant 0 : index
    %c0_36 = arith.constant 0 : index
    %c0_37 = arith.constant 0 : index
    %26 = vector.load %arg5[%c0_34, %c0_35, %c0_36, %c0_37] : memref<1x16x16x64xbf16, #tpu.memory_space<vmem>>, vector<1x16x16x64xbf16>
    %27 = vector.shape_cast %26 : vector<1x16x16x64xbf16> to vector<16x16x64xbf16>
    %28 = vector.shape_cast %25 : vector<16x16x64xbf16> to vector<1x16x16x64xbf16>
    tpu.vector_store %arg5[%c0_34, %c0_35, %c0_36, %c0_37], %28 {strides = array<i32>} : memref<1x16x16x64xbf16, #tpu.memory_space<vmem>>, vector<1x16x16x64xbf16>,
    return
  }
  func.func @transform_0(%arg0: i32) -> (i32, i32, i32, i32) {
    %c0_i32 = arith.constant 0 : i32
    %c0_i32_0 = arith.constant 0 : i32
    %c0_i32_1 = arith.constant 0 : i32
    %c0_i32_2 = arith.constant 0 : i32
    return %arg0, %c0_i32, %c0_i32_0, %c0_i32_1 : i32, i32, i32, i32
  }
  func.func @transform_1(%arg0: i32) -> (i32, i32, i32, i32) {
    %c0_i32 = arith.constant 0 : i32
    %c0_i32_0 = arith.constant 0 : i32
    %c0_i32_1 = arith.constant 0 : i32
    %c0_i32_2 = arith.constant 0 : i32
    return %arg0, %c0_i32, %c0_i32_0, %c0_i32_1 : i32, i32, i32, i32
  }
  func.func @transform_2(%arg0: i32) -> (i32, i32, i32, i32) {
    %c0_i32 = arith.constant 0 : i32
    %c0_i32_0 = arith.constant 0 : i32
    %c0_i32_1 = arith.constant 0 : i32
    %c0_i32_2 = arith.constant 0 : i32
    return %arg0, %c0_i32, %c0_i32_0, %c0_i32_1 : i32, i32, i32, i32
  }
  func.func @transform_3(%arg0: i32) -> (i32, i32, i32, i32) {
    %c0_i32 = arith.constant 0 : i32
    %c0_i32_0 = arith.constant 0 : i32
    %c0_i32_1 = arith.constant 0 : i32
    %c0_i32_2 = arith.constant 0 : i32
    return %arg0, %c0_i32, %c0_i32_0, %c0_i32_1 : i32, i32, i32, i32
  }
  func.func @transform_4(%arg0: i32) -> (i32, i32, i32, i32) {
    %c0_i32 = arith.constant 0 : i32
    %c0_i32_0 = arith.constant 0 : i32
    %c0_i32_1 = arith.constant 0 : i32
    %c0_i32_2 = arith.constant 0 : i32
    return %arg0, %c0_i32, %c0_i32_0, %c0_i32_1 : i32, i32, i32, i32
  }
}

</mosaic_0001>

<llo_original>
// kernel: _stem_impl.2
$region0: #{_stem_impl.2}
  #allocation0 [shape = 'u32[]', space=smem, size = 0x4, offset = 0x4, fixed_abs, tag = 'smem constant byte address 0x4 - core index']
  #allocation1 [shape = 'u32[144,128]{1,0:T(1,128)}', space=vmem, size = 0x12000, scoped, tag = 'internal scratch']
  %s0 = inlined_call_operand.vmem [shape: bf16[2048,160], index: 0, kind: input, shape index: {}]
  %s1 = inlined_call_operand.vmem [shape: bf16[160,64], index: 1, kind: input, shape index: {}]
  %s2 = inlined_call_operand.vmem [shape: f32[1,64], index: 2, kind: input, shape index: {}]
  %s3 = inlined_call_operand.vmem [shape: bf16[2048,64], index: 3, kind: output, shape index: {}]
  %s4 = sld [smem:[#allocation0]]
  $region45: #{_stem_impl.2} parent=0
    _
  %s6 = ssub.s32 1, %s4
  %s7 = scalar_select 0, %s6, %s4
  loop: start=0, step=1, limit=10
  $region2: #{_stem_impl.2} parent=0 // loop_pre_header
    _
  $region3: #{_stem_impl.2} parent=0 // loop_header
    %s9 = sphi 0, %s13
    %p10 = scmp.ge.s32.totalorder %s9, 10
    %s16 = sphi 0, %s28
    %s17 = sphi 0, %s24
    %s18 = sphi 0, %s16
    %s19 = sphi 0, %s17
    %s20 = sphi 0, %s18
    %s21 = sphi 0, %s19
    %s31 = sphi 0, %s33
    %s34 = sphi 0, %s31
    %s35 = sphi 0, %s34
    %s51 = sphi 0, %s35
    %s57 = sphi 0, %s59
    %s60 = sphi 0, %s57
    %s61 = sphi 0, %s60
    %s77 = sphi 0, %s61
    %s83 = sphi 0, %s85
    %s86 = sphi 0, %s83
    %s87 = sphi 0, %s86
    %s103 = sphi 0, %s87
    %s111 = sphi 0, %s113
    %s114 = sphi 0, %s111
    %s115 = sphi 0, %s114
    %s131 = sphi 0, %s115
  $region4: #{_stem_impl.2} parent=0 // loop_header_branch
    %12 = sbr.rel (%p10) target = $region8
  $region5: #{_stem_impl.2} parent=0 // loop_body
    %s14 = ssub.s32 %s9, 1
    %s15 = ssub.s32 %s9, 2
    %s22 = sadd.s32 1, %s17
    %p23 = scmp.ge.s32.totalorder %s22, 1
    %s24 = scalar_select %p23, 0, %s22
    %s25 = sadd.s32 1, %s16
    %s26 = scalar_select %p23, %s25, %s16
    %p27 = scmp.ge.s32.totalorder %s26, 8
    %s28 = scalar_select %p27, 0, %s26
    %s29 = ssub.s32 %s16, %s28
    %p30 = scmp.eq.s32.totalorder %s29, 0
    %s32 = sadd.s32 %s31, 1
    %s33 = scalar_select %p30, %s31, %s32
    %p36 = pneg %p30
    %p37 = scmp.eq.s32.totalorder %s9, 7
    %p38 = por %p36, %p37
    %p39 = scmp.ne.s32.totalorder %s31, %s34
    %p40 = scmp.eq.s32.totalorder %s9, 0
    %p41 = por %p39, %p40
    %p42 = scmp.ne.s32.totalorder %s31, %s34
    %p43 = scmp.eq.s32.totalorder %s14, 7
    %p44 = por %p42, %p43
    %p45 = scmp.ne.s32.totalorder %s34, %s35
    %p46 = scmp.eq.s32.totalorder %s14, 0
    %p47 = por %p45, %p46
    %p48 = scmp.ne.s32.totalorder %s34, %s35
    %p49 = scmp.eq.s32.totalorder %s15, 7
    %p50 = por %p48, %p49
    %p52 = scmp.ne.s32.totalorder %s35, %s51
    %p53 = scmp.eq.s32.totalorder %s15, 0
    %p54 = por %p52, %p53
    %s55 = ssub.s32 %s17, %s24
    %p56 = scmp.eq.s32.totalorder %s55, 0
    %s58 = sadd.s32 %s57, 1
    %s59 = scalar_select %p56, %s57, %s58
    %p62 = pneg %p56
    %p63 = scmp.eq.s32.totalorder %s9, 7
    %p64 = por %p62, %p63
    %p65 = scmp.ne.s32.totalorder %s57, %s60
    %p66 = scmp.eq.s32.totalorder %s9, 0
    %p67 = por %p65, %p66
    %p68 = scmp.ne.s32.totalorder %s57, %s60
    %p69 = scmp.eq.s32.totalorder %s14, 7
    %p70 = por %p68, %p69
    %p71 = scmp.ne.s32.totalorder %s60, %s61
    %p72 = scmp.eq.s32.totalorder %s14, 0
    %p73 = por %p71, %p72
    %p74 = scmp.ne.s32.totalorder %s60, %s61
    %p75 = scmp.eq.s32.totalorder %s15, 7
    %p76 = por %p74, %p75
    %p78 = scmp.ne.s32.totalorder %s61, %s77
    %p79 = scmp.eq.s32.totalorder %s15, 0
    %p80 = por %p78, %p79
    %s81 = ssub.s32 %s17, %s24
    %p82 = scmp.eq.s32.totalorder %s81, 0
    %s84 = sadd.s32 %s83, 1
    %s85 = scalar_select %p82, %s83, %s84
    %p88 = pneg %p82
    %p89 = scmp.eq.s32.totalorder %s9, 7
    %p90 = por %p88, %p89
    %p91 = scmp.ne.s32.totalorder %s83, %s86
    %p92 = scmp.eq.s32.totalorder %s9, 0
    %p93 = por %p91, %p92
    %p94 = scmp.ne.s32.totalorder %s83, %s86
    %p95 = scmp.eq.s32.totalorder %s14, 7
    %p96 = por %p94, %p95
    %p97 = scmp.ne.s32.totalorder %s86, %s87
    %p98 = scmp.eq.s32.totalorder %s14, 0
    %p99 = por %p97, %p98
    %p100 = scmp.ne.s32.totalorder %s86, %s87
    %p101 = scmp.eq.s32.totalorder %s15, 7
    %p102 = por %p100, %p101
    %p104 = scmp.ne.s32.totalorder %s87, %s103
    %p105 = scmp.eq.s32.totalorder %s15, 0
    %p106 = por %p104, %p105
    %s107 = ssub.s32 %s16, %s28
    %s108 = ssub.s32 %s17, %s24
    %s109 = sor.u32 %s107, %s108
    %p110 = scmp.eq.s32.totalorder %s109, 0
    %s112 = sadd.s32 %s111, 1
    %s113 = scalar_select %p110, %s111, %s112
    %p116 = pneg %p110
    %p117 = scmp.eq.s32.totalorder %s9, 7
    %p118 = por %p116, %p117
    %p119 = scmp.ne.s32.totalorder %s111, %s114
    %p120 = scmp.eq.s32.totalorder %s9, 0
    %p121 = por %p119, %p120
    %p122 = scmp.ne.s32.totalorder %s111, %s114
    %p123 = scmp.eq.s32.totalorder %s14, 7
    %p124 = por %p122, %p123
    %p125 = scmp.ne.s32.totalorder %s114, %s115
    %p126 = scmp.eq.s32.totalorder %s14, 0
    %p127 = por %p125, %p126
    %p128 = scmp.ne.s32.totalorder %s114, %s115
    %p129 = scmp.eq.s32.totalorder %s15, 7
    %p130 = por %p128, %p129
    %p132 = scmp.ne.s32.totalorder %s115, %s131
    %p133 = scmp.eq.s32.totalorder %s15, 0
    %p134 = por %p132, %p133
    %p135 = scmp.le.s32.totalorder 1, %s9
    %p136 = scmp.lt.s32.totalorder %s9, 9
    %p137 = pnand %p135, %p136
    %p138 = pneg %p137
    // Predicated region
    $region9: #{_stem_impl.2} parent=5 // pred_check
      _
    $region10: #{_stem_impl.2} parent=5 // pred_check_branch
      %140 = sbr.rel (%p137) target = $region12
    $region11: #{_stem_impl.2} parent=5 // pred_region
      %s141 = ssub.s32 %s9, 1
      // Predicated region
      $region13: #{_stem_impl.2} parent=11 // pred_check
        %p142 = pneg %p73
      $region14: #{_stem_impl.2} parent=11 // pred_check_branch
        %144 = sbr.rel (%p142) target = $region16
      $region15: #{_stem_impl.2} parent=11 // pred_region
        %p145 = scmp.lt.s32.totalorder %s19, 0
        %s146 = scalar_select %p145, %s19, 0
        %s147 = smul.addr %s146, 4
        %s148 = scalar_lea.vmem %s1, %s147
      $region16: #{_stem_impl.2} parent=11 // pred_fallthru
        _
      // Predicated region
      $region17: #{_stem_impl.2} parent=11 // pred_check
        %p149 = pneg %p99
      $region18: #{_stem_impl.2} parent=11 // pred_check_branch
        %151 = sbr.rel (%p149) target = $region20
      $region19: #{_stem_impl.2} parent=11 // pred_region
        %p152 = scmp.lt.s32.totalorder %s19, 0
        %s153 = scalar_select %p152, %s19, 0
        %s154 = scalar_lea.vmem %s2, %s153
      $region20: #{_stem_impl.2} parent=11 // pred_fallthru
        _
    $region12: #{_stem_impl.2} parent=5 // pred_fallthru
      _
    %p155 = scmp.lt.s32.totalorder %s9, 8
    // Predicated region
    $region21: #{_stem_impl.2} parent=5 // pred_check
      %p156 = pneg %p155
    $region22: #{_stem_impl.2} parent=5 // pred_check_branch
      %158 = sbr.rel (%p156) target = $region24
    $region23: #{_stem_impl.2} parent=5 // pred_region
      // Predicated region
      $region25: #{_stem_impl.2} parent=23 // pred_check
        %p159 = pneg %p41
      $region26: #{_stem_impl.2} parent=23 // pred_check_branch
        %161 = sbr.rel (%p159) target = $region28
      $region27: #{_stem_impl.2} parent=23 // pred_region
        %s162 = smul.u32 32, %s16
        %p163 = scmp.lt.s32.totalorder %s162, 255
        %s164 = scalar_select %p163, %s162, 255
        %s165 = smul.addr %s164, 2
        %s166 = smul.addr %s165, 4
        %s167 = scalar_lea.vmem %s0, %s166
        %s168 = smul.u32 32, %s16
      $region28: #{_stem_impl.2} parent=23 // pred_fallthru
        _
    $region24: #{_stem_impl.2} parent=5 // pred_fallthru
      _
    %p169 = scmp.le.s32.totalorder 1, %s9
    %p170 = scmp.lt.s32.totalorder %s9, 9
    %p171 = pnand %p169, %p170
    %p172 = pneg %p171
    // Predicated region
    $region29: #{_stem_impl.2} parent=5 // pred_check
      _
    $region30: #{_stem_impl.2} parent=5 // pred_check_branch
      %174 = sbr.rel (%p171) target = $region32
    $region31: #{_stem_impl.2} parent=5 // pred_region
      %s175 = ssub.s32 %s9, 1
      %s176 = smul.u32 32, %s18
      %p177 = scmp.lt.s32.totalorder %s176, 255
      %s178 = scalar_select %p177, %s176, 255
      %s179 = smul.addr %s178, 2
      %s180 = smul.addr %s179, 4
      %s181 = scalar_lea.vmem %s0, %s180
      %p182 = pneg %p47
      %p183 = pneg %p44
      %p184 = scmp.lt.s32.totalorder %s19, 0
      %s185 = scalar_select %p184, %s19, 0
      %s186 = smul.addr %s185, 4
      %s187 = scalar_lea.vmem %s1, %s186
      %p188 = pneg %p73
      %p189 = pneg %p70
      %p190 = scmp.lt.s32.totalorder %s19, 0
      %s191 = scalar_select %p190, %s19, 0
      %s192 = scalar_lea.vmem %s2, %s191
      %p193 = pneg %p99
      %p194 = pneg %p96
      %p195 = pneg %p127
      %p196 = pneg %p124
      %s197 = smul.u32 32, %s18
      %p198 = scmp.lt.s32.totalorder %s197, 255
      %s199 = scalar_select %p198, %s197, 255
      %p200 = scmp.lt.s32.totalorder %s19, 0
      %s201 = scalar_select %p200, %s19, 0
      %s202 = sadd.s32 %s201, %s199
      %s203 = smul.addr %s202, 4
      %s204 = scalar_lea.vmem %s3, %s203
      %s205 = smul.u32 32, %s18
      %p206 = scmp.lt.s32.totalorder %s205, 255
      %s207 = scalar_select %p206, %s205, 255
      %s208 = smul.addr %s207, 2
      %s209 = smul.addr %s208, 4
      %s210 = scalar_lea.vmem %s0, %s209
      %s211 = smul.u32 32, %s18
      %p212 = scmp.lt.s32.totalorder %s19, 0
      %s213 = scalar_select %p212, %s19, 0
      %s214 = smul.addr %s213, 4
      %s215 = scalar_lea.vmem %s1, %s214
      %p216 = scmp.lt.s32.totalorder %s19, 0
      %s217 = scalar_select %p216, %s19, 0
      %s218 = scalar_lea.vmem %s2, %s217
      %s219 = smul.u32 32, %s18
      %p220 = scmp.lt.s32.totalorder %s219, 255
      %s221 = scalar_select %p220, %s219, 255
      %p222 = scmp.lt.s32.totalorder %s19, 0
      %s223 = scalar_select %p222, %s19, 0
      %s224 = sadd.s32 %s223, %s221
      %s225 = smul.addr %s224, 4
      %s226 = scalar_lea.vmem %s3, %s225
      %s227 = smul.u32 32, %s18
      %v229 = vld [vmem:[%s210] sm:$0xff]
      %v230 = vld [vmem:[%s210 + $0x8] sm:$0xff]
      %v231 = vld [vmem:[%s210 + $0x10] sm:$0xff]
      %v232 = vld [vmem:[%s210 + $0x18] sm:$0xff]
      %v233 = vld [vmem:[%s210 + $0x20] sm:$0xff]
      %v234 = vld [vmem:[%s210 + $0x28] sm:$0xff]
      %v235 = vld [vmem:[%s210 + $0x30] sm:$0xff]
      %v236 = vld [vmem:[%s210 + $0x38] sm:$0xff]
      %v237 = vld [vmem:[%s210 + $0x40] sm:$0xff]
      %v238 = vld [vmem:[%s210 + $0x48] sm:$0xff]
      %v239 = vld [vmem:[%s210 + $0x50] sm:$0xff]
      %v240 = vld [vmem:[%s210 + $0x58] sm:$0xff]
      %v241 = vld [vmem:[%s210 + $0x60] sm:$0xff]
      %v242 = vld [vmem:[%s210 + $0x68] sm:$0xff]
      %v243 = vld [vmem:[%s210 + $0x70] sm:$0xff]
      %v244 = vld [vmem:[%s210 + $0x78] sm:$0xff]
      %v245 = vld [vmem:[%s210 + $0x80] sm:$0xff]
      %v246 = vld [vmem:[%s210 + $0x88] sm:$0xff]
      %v247 = vld [vmem:[%s210 + $0x90] sm:$0xff]
      %v248 = vld [vmem:[%s210 + $0x98] sm:$0xff]
      %v249 = vld [vmem:[%s210 + $0xa0] sm:$0xff]
      %v250 = vld [vmem:[%s210 + $0xa8] sm:$0xff]
      %v251 = vld [vmem:[%s210 + $0xb0] sm:$0xff]
      %v252 = vld [vmem:[%s210 + $0xb8] sm:$0xff]
      %v253 = vld [vmem:[%s210 + $0xc0] sm:$0xff]
      %v254 = vld [vmem:[%s210 + $0xc8] sm:$0xff]
      %v255 = vld [vmem:[%s210 + $0xd0] sm:$0xff]
      %v256 = vld [vmem:[%s210 + $0xd8] sm:$0xff]
      %v257 = vld [vmem:[%s210 + $0xe0] sm:$0xff]
      %v258 = vld [vmem:[%s210 + $0xe8] sm:$0xff]
      %v259 = vld [vmem:[%s210 + $0xf0] sm:$0xff]
      %v260 = vld [vmem:[%s210 + $0xf8] sm:$0xff]
      %v261 = vld [vmem:[%s215] sm:$0xf]
      %v262 = vld [vmem:[%s215 + $0x4] sm:$0xf]
      %v263 = vld [vmem:[%s215 + $0x8] sm:$0xf]
      %v264 = vld [vmem:[%s215 + $0xc] sm:$0xf]
      %v265 = vld [vmem:[%s215 + $0x10] sm:$0xf]
      %v266 = vld [vmem:[%s215 + $0x14] sm:$0xf]
      %v267 = vld [vmem:[%s215 + $0x18] sm:$0xf]
      %v268 = vld [vmem:[%s215 + $0x1c] sm:$0xf]
      %v269 = vld [vmem:[%s215 + $0x20] sm:$0xf]
      %v270 = vld [vmem:[%s215 + $0x24] sm:$0xf]
      %v271 = vld [vmem:[%s215 + $0x28] sm:$0xf]
      %v272 = vld [vmem:[%s215 + $0x2c] sm:$0xf]
      %v273 = vld [vmem:[%s215 + $0x30] sm:$0xf]
      %v274 = vld [vmem:[%s215 + $0x34] sm:$0xf]
      %v275 = vld [vmem:[%s215 + $0x38] sm:$0xf]
      %v276 = vld [vmem:[%s215 + $0x3c] sm:$0xf]
      %v277 = vld [vmem:[%s215 + $0x40] sm:$0xf]
      %v278 = vld [vmem:[%s215 + $0x44] sm:$0xf]
      %v279 = vld [vmem:[%s215 + $0x48] sm:$0xf]
      %v280 = vld [vmem:[%s215 + $0x4c] sm:$0xf]
      %v281 = vld [vmem:[%s218] sm:$0x1]
      %v283 = vlaneseq
      %v284 = vshrl.u32 %v283, 7
      %v285 = vsub.s32 0, %v284
      %v286 = vrot.slane %v281, %v285
      %v320 = vunpack.c.l.b16 %v229
      %v321 = vunpack.c.h.b16 %v229
      %v322 = vunpack.c.l.b16 %v230
      %v323 = vunpack.c.h.b16 %v230
      %v324 = vunpack.c.l.b16 %v231
      %v325 = vunpack.c.h.b16 %v231
      %v326 = vunpack.c.l.b16 %v232
      %v327 = vunpack.c.h.b16 %v232
      %v328 = vunpack.c.l.b16 %v233
      %v329 = vunpack.c.h.b16 %v233
      %v330 = vunpack.c.l.b16 %v234
      %v331 = vunpack.c.h.b16 %v234
      %v332 = vunpack.c.l.b16 %v235
      %v333 = vunpack.c.h.b16 %v235
      %v334 = vunpack.c.l.b16 %v236
      %v335 = vunpack.c.h.b16 %v236
      %v336 = vunpack.c.l.b16 %v237
      %v337 = vunpack.c.h.b16 %v237
      %v338 = vunpack.c.l.b16 %v238
      %v339 = vunpack.c.h.b16 %v238
      %v340 = vunpack.c.l.b16 %v239
      %v341 = vunpack.c.h.b16 %v239
      %v342 = vunpack.c.l.b16 %v240
      %v343 = vunpack.c.h.b16 %v240
      %v344 = vunpack.c.l.b16 %v241
      %v345 = vunpack.c.h.b16 %v241
      %v346 = vunpack.c.l.b16 %v242
      %v347 = vunpack.c.h.b16 %v242
      %v348 = vunpack.c.l.b16 %v243
      %v349 = vunpack.c.h.b16 %v243
      %v350 = vunpack.c.l.b16 %v244
      %v351 = vunpack.c.h.b16 %v244
      %v352 = vunpack.c.l.b16 %v245
      %v353 = vunpack.c.h.b16 %v245
      %v354 = vunpack.c.l.b16 %v246
      %v355 = vunpack.c.h.b16 %v246
      %v356 = vunpack.c.l.b16 %v247
      %v357 = vunpack.c.h.b16 %v247
      %v358 = vunpack.c.l.b16 %v248
      %v359 = vunpack.c.h.b16 %v248
      %v360 = vunpack.c.l.b16 %v249
      %v361 = vunpack.c.h.b16 %v249
      %v362 = vunpack.c.l.b16 %v250
      %v363 = vunpack.c.h.b16 %v250
      %v364 = vunpack.c.l.b16 %v251
      %v365 = vunpack.c.h.b16 %v251
      %v366 = vunpack.c.l.b16 %v252
      %v367 = vunpack.c.h.b16 %v252
      %v368 = vunpack.c.l.b16 %v253
      %v369 = vunpack.c.h.b16 %v253
      %v370 = vunpack.c.l.b16 %v254
      %v371 = vunpack.c.h.b16 %v254
      %v372 = vunpack.c.l.b16 %v255
      %v373 = vunpack.c.h.b16 %v255
      %v374 = vunpack.c.l.b16 %v256
      %v375 = vunpack.c.h.b16 %v256
      %v376 = vunpack.c.l.b16 %v257
      %v377 = vunpack.c.h.b16 %v257
      %v378 = vunpack.c.l.b16 %v258
      %v379 = vunpack.c.h.b16 %v258
      %v380 = vunpack.c.l.b16 %v259
      %v381 = vunpack.c.h.b16 %v259
      %v382 = vunpack.c.l.b16 %v260
      %v383 = vunpack.c.h.b16 %v260
      %v384 = vpack.c.b16 %v322, %v320
      %v385 = vpack.c.b16 %v323, %v321
      %v386 = vpack.c.b16 %v326, %v324
      %v387 = vpack.c.b16 %v327, %v325
      %v388 = vpack.c.b16 %v330, %v328
      %v389 = vpack.c.b16 %v331, %v329
      %v390 = vpack.c.b16 %v334, %v332
      %v391 = vpack.c.b16 %v335, %v333
      %v392 = vpack.c.b16 %v338, %v336
      %v393 = vpack.c.b16 %v339, %v337
      %v394 = vpack.c.b16 %v342, %v340
      %v395 = vpack.c.b16 %v343, %v341
      %v396 = vpack.c.b16 %v346, %v344
      %v397 = vpack.c.b16 %v347, %v345
      %v398 = vpack.c.b16 %v350, %v348
      %v399 = vpack.c.b16 %v351, %v349
      %v400 = vpack.c.b16 %v354, %v352
      %v401 = vpack.c.b16 %v355, %v353
      %v402 = vpack.c.b16 %v358, %v356
      %v403 = vpack.c.b16 %v359, %v357
      %v404 = vpack.c.b16 %v362, %v360
      %v405 = vpack.c.b16 %v363, %v361
      %v406 = vpack.c.b16 %v366, %v364
      %v407 = vpack.c.b16 %v367, %v365
      %v408 = vpack.c.b16 %v370, %v368
      %v409 = vpack.c.b16 %v371, %v369
      %v410 = vpack.c.b16 %v374, %v372
      %v411 = vpack.c.b16 %v375, %v373
      %v412 = vpack.c.b16 %v378, %v376
      %v413 = vpack.c.b16 %v379, %v377
      %v414 = vpack.c.b16 %v382, %v380
      %v415 = vpack.c.b16 %v383, %v381
      %v452 = vunpack.c.l.b16 %v261
      %v453 = vunpack.c.l.b16 %v262
      %v454 = vunpack.c.l.b16 %v263
      %v455 = vunpack.c.l.b16 %v264
      %v456 = vunpack.c.l.b16 %v265
      %v457 = vunpack.c.l.b16 %v266
      %v458 = vunpack.c.l.b16 %v267
      %v459 = vunpack.c.l.b16 %v268
      %v460 = vunpack.c.l.b16 %v269
      %v461 = vunpack.c.l.b16 %v270
      %v462 = vunpack.c.l.b16 %v271
      %v463 = vunpack.c.l.b16 %v272
      %v464 = vunpack.c.l.b16 %v273
      %v465 = vunpack.c.l.b16 %v274
      %v466 = vunpack.c.l.b16 %v275
      %v467 = vunpack.c.l.b16 %v276
      %v468 = vunpack.c.l.b16 %v277
      %v469 = vunpack.c.l.b16 %v278
      %v470 = vunpack.c.l.b16 %v279
      %v471 = vunpack.c.l.b16 %v280
      %v472 = vpack.c.b16 %v453, %v452
      %v473 = vpack.c.b16 %v455, %v454
      %v474 = vpack.c.b16 %v457, %v456
      %v475 = vpack.c.b16 %v459, %v458
      %v476 = vpack.c.b16 %v461, %v460
      %v477 = vpack.c.b16 %v463, %v462
      %v478 = vpack.c.b16 %v465, %v464
      %v479 = vpack.c.b16 %v467, %v466
      %v480 = vpack.c.b16 %v469, %v468
      %v481 = vpack.c.b16 %v471, %v470
      %vm492 = vcmask 261120
      %v494 = vsel %vm492, %v385, 0
      %v497 = vsel %vm492, %v387, 0
      %v500 = vsel %vm492, %v389, 0
      %v503 = vsel %vm492, %v391, 0
      %v506 = vsel %vm492, %v393, 0
      %v509 = vsel %vm492, %v395, 0
      %v512 = vsel %vm492, %v397, 0
      %v515 = vsel %vm492, %v399, 0
      %v518 = vsel %vm492, %v401, 0
      %v521 = vsel %vm492, %v403, 0
      %v524 = vsel %vm492, %v405, 0
      %v527 = vsel %vm492, %v407, 0
      %v530 = vsel %vm492, %v409, 0
      %v533 = vsel %vm492, %v411, 0
      %v536 = vsel %vm492, %v413, 0
      %v539 = vsel %vm492, %v415, 0
      %541 = vmatprep.subr.bf16.mxu0 0
      %542 = vmatpush1.bf16.msra.mxu0 %v479
      %543 = vmatprep.subr.bf16.mxu0 0
      %544 = vmatpush1.bf16.msra.mxu0 %v478
      %545 = vmatprep.subr.bf16.mxu0 0
      %546 = vmatpush1.bf16.msra.mxu0 %v477
      %547 = vmatprep.subr.bf16.mxu0 0
      %548 = vmatpush1.bf16.msra.mxu0 %v476
      %549 = vmatprep.subr.bf16.mxu0 0
      %550 = vmatpush1.bf16.msra.mxu0 %v475
      %551 = vmatprep.subr.bf16.mxu0 0
      %552 = vmatpush1.bf16.msra.mxu0 %v474
      %553 = vmatprep.subr.bf16.mxu0 0
      %554 = vmatpush1.bf16.msra.mxu0 %v473
      %555 = vmatprep.subr.bf16.mxu0 0
      %556 = vmatpush1.bf16.msra.mxu0 %v472
      %557 = vmatprep.subr.bf16.mxu0 0
      %558 = vmatpush2.bf16.msra.mxu0 0
      %559 = vmatprep.subr.bf16.mxu0 0
      %560 = vmatpush2.bf16.msra.mxu0 0
      %561 = vmatprep.subr.bf16.mxu0 0
      %562 = vmatpush2.bf16.msra.mxu0 0
      %563 = vmatprep.subr.bf16.mxu0 0
      %564 = vmatpush2.bf16.msra.mxu0 0
      %565 = vmatprep.subr.bf16.mxu0 0
      %566 = vmatpush2.bf16.msra.mxu0 0
      %567 = vmatprep.subr.bf16.mxu0 0
      %568 = vmatpush2.bf16.msra.mxu0 0
      %569 = vmatprep.subr.bf16.mxu0 0
      %570 = vmatpush2.bf16.msra.mxu0 %v481
      %571 = vmatprep.subr.bf16.mxu0 0
      %572 = vmatpush2.bf16.msra.mxu0 %v480
      %573 = vmatprep.mubr.bf16.mxu0 %v494
      %574 = vmatmul.mubr.bf16.gmra.mxu0 %v384
      %v575 = vpop.f32.mrf.mxu0
      %v576 = vadd.f32 %v286, %v575
      %v577 = vpop.f32.mrf.mxu0
      %v578 = vpop.f32.mrf.mxu0
      %v579 = vadd.f32 %v286, %v578
      %v580 = vpop.f32.mrf.mxu0
      %581 = vmatprep.mubr.bf16.mxu0 %v497
      %582 = vmatmul.mubr.bf16.gmra.mxu0 %v386
      %v583 = vpop.f32.mrf.mxu0
      %v584 = vadd.f32 %v286, %v583
      %v585 = vpop.f32.mrf.mxu0
      %v586 = vpop.f32.mrf.mxu0
      %v587 = vadd.f32 %v286, %v586
      %v588 = vpop.f32.mrf.mxu0
      %589 = vmatprep.mubr.bf16.mxu0 %v500
      %590 = vmatmul.mubr.bf16.gmra.mxu0 %v388
      %v591 = vpop.f32.mrf.mxu0
      %v592 = vadd.f32 %v286, %v591
      %v593 = vpop.f32.mrf.mxu0
      %v594 = vpop.f32.mrf.mxu0
      %v595 = vadd.f32 %v286, %v594
      %v596 = vpop.f32.mrf.mxu0
      %597 = vmatprep.mubr.bf16.mxu0 %v503
      %598 = vmatmul.mubr.bf16.gmra.mxu0 %v390
      %v599 = vpop.f32.mrf.mxu0
      %v600 = vadd.f32 %v286, %v599
      %v601 = vpop.f32.mrf.mxu0
      %v602 = vpop.f32.mrf.mxu0
      %v603 = vadd.f32 %v286, %v602
      %v604 = vpop.f32.mrf.mxu0
      %605 = vmatprep.mubr.bf16.mxu0 %v506
      %606 = vmatmul.mubr.bf16.gmra.mxu0 %v392
      %v607 = vpop.f32.mrf.mxu0
      %v608 = vadd.f32 %v286, %v607
      %v609 = vpop.f32.mrf.mxu0
      %v610 = vpop.f32.mrf.mxu0
      %v611 = vadd.f32 %v286, %v610
      %v612 = vpop.f32.mrf.mxu0
      %613 = vmatprep.mubr.bf16.mxu0 %v509
      %614 = vmatmul.mubr.bf16.gmra.mxu0 %v394
      %v615 = vpop.f32.mrf.mxu0
      %v616 = vadd.f32 %v286, %v615
      %v617 = vpop.f32.mrf.mxu0
      %v618 = vpop.f32.mrf.mxu0
      %v619 = vadd.f32 %v286, %v618
      %v620 = vpop.f32.mrf.mxu0
      %621 = vmatprep.mubr.bf16.mxu0 %v512
      %622 = vmatmul.mubr.bf16.gmra.mxu0 %v396
      %v623 = vpop.f32.mrf.mxu0
      %v624 = vadd.f32 %v286, %v623
      %v625 = vpop.f32.mrf.mxu0
      %v626 = vpop.f32.mrf.mxu0
      %v627 = vadd.f32 %v286, %v626
      %v628 = vpop.f32.mrf.mxu0
      %629 = vmatprep.mubr.bf16.mxu0 %v515
      %630 = vmatmul.mubr.bf16.gmra.mxu0 %v398
      %v631 = vpop.f32.mrf.mxu0
      %v632 = vadd.f32 %v286, %v631
      %v633 = vpop.f32.mrf.mxu0
      %v634 = vpop.f32.mrf.mxu0
      %v635 = vadd.f32 %v286, %v634
      %v636 = vpop.f32.mrf.mxu0
      %637 = vmatprep.mubr.bf16.mxu0 %v518
      %638 = vmatmul.mubr.bf16.gmra.mxu0 %v400
      %v639 = vpop.f32.mrf.mxu0
      %v640 = vadd.f32 %v286, %v639
      %v641 = vpop.f32.mrf.mxu0
      %v642 = vpop.f32.mrf.mxu0
      %v643 = vadd.f32 %v286, %v642
      %v644 = vpop.f32.mrf.mxu0
      %645 = vmatprep.mubr.bf16.mxu0 %v521
      %646 = vmatmul.mubr.bf16.gmra.mxu0 %v402
      %v647 = vpop.f32.mrf.mxu0
      %v648 = vadd.f32 %v286, %v647
      %v649 = vpop.f32.mrf.mxu0
      %v650 = vpop.f32.mrf.mxu0
      %v651 = vadd.f32 %v286, %v650
      %v652 = vpop.f32.mrf.mxu0
      %653 = vmatprep.mubr.bf16.mxu0 %v524
      %654 = vmatmul.mubr.bf16.gmra.mxu0 %v404
      %v655 = vpop.f32.mrf.mxu0
      %v656 = vadd.f32 %v286, %v655
      %v657 = vpop.f32.mrf.mxu0
      %v658 = vpop.f32.mrf.mxu0
      %v659 = vadd.f32 %v286, %v658
      %v660 = vpop.f32.mrf.mxu0
      %661 = vmatprep.mubr.bf16.mxu0 %v527
      %662 = vmatmul.mubr.bf16.gmra.mxu0 %v406
      %v663 = vpop.f32.mrf.mxu0
      %v664 = vadd.f32 %v286, %v663
      %v665 = vpop.f32.mrf.mxu0
      %v666 = vpop.f32.mrf.mxu0
      %v667 = vadd.f32 %v286, %v666
      %v668 = vpop.f32.mrf.mxu0
      %669 = vmatprep.mubr.bf16.mxu0 %v530
      %670 = vmatmul.mubr.bf16.gmra.mxu0 %v408
      %v671 = vpop.f32.mrf.mxu0
      %v672 = vadd.f32 %v286, %v671
      %v673 = vpop.f32.mrf.mxu0
      %v674 = vpop.f32.mrf.mxu0
      %v675 = vadd.f32 %v286, %v674
      %v676 = vpop.f32.mrf.mxu0
      %677 = vmatprep.mubr.bf16.mxu0 %v533
      %678 = vmatmul.mubr.bf16.gmra.mxu0 %v410
      %v679 = vpop.f32.mrf.mxu0
      %v680 = vadd.f32 %v286, %v679
      %v681 = vpop.f32.mrf.mxu0
      %v682 = vpop.f32.mrf.mxu0
      %v683 = vadd.f32 %v286, %v682
      %v684 = vpop.f32.mrf.mxu0
      %685 = vmatprep.mubr.bf16.mxu0 %v536
      %686 = vmatmul.mubr.bf16.gmra.mxu0 %v412
      %v687 = vpop.f32.mrf.mxu0
      %v688 = vadd.f32 %v286, %v687
      %v689 = vpop.f32.mrf.mxu0
      %v690 = vpop.f32.mrf.mxu0
      %v691 = vadd.f32 %v286, %v690
      %v692 = vpop.f32.mrf.mxu0
      %693 = vmatprep.mubr.bf16.mxu0 %v539
      %694 = vmatmul.mubr.bf16.gmra.mxu0 %v414
      %v695 = vpop.f32.mrf.mxu0
      %v696 = vadd.f32 %v286, %v695
      %v697 = vpop.f32.mrf.mxu0
      %v698 = vpop.f32.mrf.mxu0
      %v699 = vadd.f32 %v286, %v698
      %v700 = vpop.f32.mrf.mxu0
      %701 = vdwg.mxu0
      %v702 = vmax.f32 %v576, 0.0
      %v703 = vmax.f32 %v579, 0.0
      %v704 = vmax.f32 %v584, 0.0
      %v705 = vmax.f32 %v587, 0.0
      %v706 = vmax.f32 %v592, 0.0
      %v707 = vmax.f32 %v595, 0.0
      %v708 = vmax.f32 %v600, 0.0
      %v709 = vmax.f32 %v603, 0.0
      %v710 = vmax.f32 %v608, 0.0
      %v711 = vmax.f32 %v611, 0.0
      %v712 = vmax.f32 %v616, 0.0
      %v713 = vmax.f32 %v619, 0.0
      %v714 = vmax.f32 %v624, 0.0
      %v715 = vmax.f32 %v627, 0.0
      %v716 = vmax.f32 %v632, 0.0
      %v717 = vmax.f32 %v635, 0.0
      %v718 = vmax.f32 %v640, 0.0
      %v719 = vmax.f32 %v643, 0.0
      %v720 = vmax.f32 %v648, 0.0
      %v721 = vmax.f32 %v651, 0.0
      %v722 = vmax.f32 %v656, 0.0
      %v723 = vmax.f32 %v659, 0.0
      %v724 = vmax.f32 %v664, 0.0
      %v725 = vmax.f32 %v667, 0.0
      %v726 = vmax.f32 %v672, 0.0
      %v727 = vmax.f32 %v675, 0.0
      %v728 = vmax.f32 %v680, 0.0
      %v729 = vmax.f32 %v683, 0.0
      %v730 = vmax.f32 %v688, 0.0
      %v731 = vmax.f32 %v691, 0.0
      %v732 = vmax.f32 %v696, 0.0
      %v733 = vmax.f32 %v699, 0.0
      %v734 = vpack.c.bf16 %v703, %v702
      %v735 = vpack.c.bf16 %v705, %v704
      %v736 = vpack.c.bf16 %v707, %v706
      %v737 = vpack.c.bf16 %v709, %v708
      %v738 = vpack.c.bf16 %v711, %v710
      %v739 = vpack.c.bf16 %v713, %v712
      %v740 = vpack.c.bf16 %v715, %v714
      %v741 = vpack.c.bf16 %v717, %v716
      %v742 = vpack.c.bf16 %v719, %v718
      %v743 = vpack.c.bf16 %v721, %v720
      %v744 = vpack.c.bf16 %v723, %v722
      %v745 = vpack.c.bf16 %v725, %v724
      %v746 = vpack.c.bf16 %v727, %v726
      %v747 = vpack.c.bf16 %v729, %v728
      %v748 = vpack.c.bf16 %v731, %v730
      %v749 = vpack.c.bf16 %v733, %v732
      %v766 = vunpack.c.l.b16 %v734
      %v767 = vunpack.c.h.b16 %v734
      %v768 = vunpack.c.l.b16 %v735
      %v769 = vunpack.c.h.b16 %v735
      %v770 = vunpack.c.l.b16 %v736
      %v771 = vunpack.c.h.b16 %v736
      %v772 = vunpack.c.l.b16 %v737
      %v773 = vunpack.c.h.b16 %v737
      %v774 = vunpack.c.l.b16 %v738
      %v775 = vunpack.c.h.b16 %v738
      %v776 = vunpack.c.l.b16 %v739
      %v777 = vunpack.c.h.b16 %v739
      %v778 = vunpack.c.l.b16 %v740
      %v779 = vunpack.c.h.b16 %v740
      %v780 = vunpack.c.l.b16 %v741
      %v781 = vunpack.c.h.b16 %v741
      %v782 = vunpack.c.l.b16 %v742
      %v783 = vunpack.c.h.b16 %v742
      %v784 = vunpack.c.l.b16 %v743
      %v785 = vunpack.c.h.b16 %v743
      %v786 = vunpack.c.l.b16 %v744
      %v787 = vunpack.c.h.b16 %v744
      %v788 = vunpack.c.l.b16 %v745
      %v789 = vunpack.c.h.b16 %v745
      %v790 = vunpack.c.l.b16 %v746
      %v791 = vunpack.c.h.b16 %v746
      %v792 = vunpack.c.l.b16 %v747
      %v793 = vunpack.c.h.b16 %v747
      %v794 = vunpack.c.l.b16 %v748
      %v795 = vunpack.c.h.b16 %v748
      %v796 = vunpack.c.l.b16 %v749
      %v797 = vunpack.c.h.b16 %v749
      %v798 = vpack.c.b16 %v766, %v766
      %v799 = vpack.c.b16 %v767, %v767
      %v800 = vpack.c.b16 %v768, %v768
      %v801 = vpack.c.b16 %v769, %v769
      %v802 = vpack.c.b16 %v770, %v770
      %v803 = vpack.c.b16 %v771, %v771
      %v804 = vpack.c.b16 %v772, %v772
      %v805 = vpack.c.b16 %v773, %v773
      %v806 = vpack.c.b16 %v774, %v774
      %v807 = vpack.c.b16 %v775, %v775
      %v808 = vpack.c.b16 %v776, %v776
      %v809 = vpack.c.b16 %v777, %v777
      %v810 = vpack.c.b16 %v778, %v778
      %v811 = vpack.c.b16 %v779, %v779
      %v812 = vpack.c.b16 %v780, %v780
      %v813 = vpack.c.b16 %v781, %v781
      %v814 = vpack.c.b16 %v782, %v782
      %v815 = vpack.c.b16 %v783, %v783
      %v816 = vpack.c.b16 %v784, %v784
      %v817 = vpack.c.b16 %v785, %v785
      %v818 = vpack.c.b16 %v786, %v786
      %v819 = vpack.c.b16 %v787, %v787
      %v820 = vpack.c.b16 %v788, %v788
      %v821 = vpack.c.b16 %v789, %v789
      %v822 = vpack.c.b16 %v790, %v790
      %v823 = vpack.c.b16 %v791, %v791
      %v824 = vpack.c.b16 %v792, %v792
      %v825 = vpack.c.b16 %v793, %v793
      %v826 = vpack.c.b16 %v794, %v794
      %v827 = vpack.c.b16 %v795, %v795
      %v828 = vpack.c.b16 %v796, %v796
      %v829 = vpack.c.b16 %v797, %v797
      %vm862 = vcmask 519168
      %863 = vst.msk [vmem:[%s226] sm:$0xf] %vm862, %v798
      %864 = vst.msk [vmem:[%s226 + $0x4] sm:$0xf] %vm862, %v799
      %865 = vst.msk [vmem:[%s226 + $0x8] sm:$0xf] %vm862, %v800
      %866 = vst.msk [vmem:[%s226 + $0xc] sm:$0xf] %vm862, %v801
      %867 = vst.msk [vmem:[%s226 + $0x10] sm:$0xf] %vm862, %v802
      %868 = vst.msk [vmem:[%s226 + $0x14] sm:$0xf] %vm862, %v803
      %869 = vst.msk [vmem:[%s226 + $0x18] sm:$0xf] %vm862, %v804
      %870 = vst.msk [vmem:[%s226 + $0x1c] sm:$0xf] %vm862, %v805
      %871 = vst.msk [vmem:[%s226 + $0x20] sm:$0xf] %vm862, %v806
      %872 = vst.msk [vmem:[%s226 + $0x24] sm:$0xf] %vm862, %v807
      %873 = vst.msk [vmem:[%s226 + $0x28] sm:$0xf] %vm862, %v808
      %874 = vst.msk [vmem:[%s226 + $0x2c] sm:$0xf] %vm862, %v809
      %875 = vst.msk [vmem:[%s226 + $0x30] sm:$0xf] %vm862, %v810
      %876 = vst.msk [vmem:[%s226 + $0x34] sm:$0xf] %vm862, %v811
      %877 = vst.msk [vmem:[%s226 + $0x38] sm:$0xf] %vm862, %v812
      %878 = vst.msk [vmem:[%s226 + $0x3c] sm:$0xf] %vm862, %v813
      %879 = vst.msk [vmem:[%s226 + $0x40] sm:$0xf] %vm862, %v814
      %880 = vst.msk [vmem:[%s226 + $0x44] sm:$0xf] %vm862, %v815
      %881 = vst.msk [vmem:[%s226 + $0x48] sm:$0xf] %vm862, %v816
      %882 = vst.msk [vmem:[%s226 + $0x4c] sm:$0xf] %vm862, %v817
      %883 = vst.msk [vmem:[%s226 + $0x50] sm:$0xf] %vm862, %v818
      %884 = vst.msk [vmem:[%s226 + $0x54] sm:$0xf] %vm862, %v819
      %885 = vst.msk [vmem:[%s226 + $0x58] sm:$0xf] %vm862, %v820
      %886 = vst.msk [vmem:[%s226 + $0x5c] sm:$0xf] %vm862, %v821
      %887 = vst.msk [vmem:[%s226 + $0x60] sm:$0xf] %vm862, %v822
      %888 = vst.msk [vmem:[%s226 + $0x64] sm:$0xf] %vm862, %v823
      %889 = vst.msk [vmem:[%s226 + $0x68] sm:$0xf] %vm862, %v824
      %890 = vst.msk [vmem:[%s226 + $0x6c] sm:$0xf] %vm862, %v825
      %891 = vst.msk [vmem:[%s226 + $0x70] sm:$0xf] %vm862, %v826
      %892 = vst.msk [vmem:[%s226 + $0x74] sm:$0xf] %vm862, %v827
      %893 = vst.msk [vmem:[%s226 + $0x78] sm:$0xf] %vm862, %v828
      %894 = vst.msk [vmem:[%s226 + $0x7c] sm:$0xf] %vm862, %v829
      %s895 = smul.u32 32, %s18
      %p896 = scmp.lt.s32.totalorder %s895, 255
      %s897 = scalar_select %p896, %s895, 255
      %p898 = scmp.lt.s32.totalorder %s19, 0
      %s899 = scalar_select %p898, %s19, 0
      %s900 = sadd.s32 %s899, %s897
      %s901 = smul.addr %s900, 4
      %s902 = scalar_lea.vmem %s3, %s901
      // Predicated region
      $region33: #{_stem_impl.2} parent=31 // pred_check
        %p903 = pneg %p124
      $region34: #{_stem_impl.2} parent=31 // pred_check_branch
        %905 = sbr.rel (%p903) target = $region36
      $region35: #{_stem_impl.2} parent=31 // pred_region
        %s906 = smul.u32 32, %s18
      $region36: #{_stem_impl.2} parent=31 // pred_fallthru
        _
    $region32: #{_stem_impl.2} parent=5 // pred_fallthru
      _
    %p907 = scmp.le.s32.totalorder 2, %s9
    // Predicated region
    $region37: #{_stem_impl.2} parent=5 // pred_check
      %p908 = pneg %p907
    $region38: #{_stem_impl.2} parent=5 // pred_check_branch
      %910 = sbr.rel (%p908) target = $region40
    $region39: #{_stem_impl.2} parent=5 // pred_region
      %s911 = ssub.s32 %s9, 2
      // Predicated region
      $region41: #{_stem_impl.2} parent=39 // pred_check
        %p912 = pneg %p130
      $region42: #{_stem_impl.2} parent=39 // pred_check_branch
        %914 = sbr.rel (%p912) target = $region44
      $region43: #{_stem_impl.2} parent=39 // pred_region
        %s915 = smul.u32 32, %s20
        %p916 = scmp.lt.s32.totalorder %s915, 255
        %s917 = scalar_select %p916, %s915, 255
        %p918 = scmp.lt.s32.totalorder %s21, 0
        %s919 = scalar_select %p918, %s21, 0
        %s920 = sadd.s32 %s919, %s917
        %s921 = smul.addr %s920, 4
        %s922 = scalar_lea.vmem %s3, %s921
      $region44: #{_stem_impl.2} parent=39 // pred_fallthru
        _
    $region40: #{_stem_impl.2} parent=5 // pred_fallthru
      _
  $region6: #{_stem_impl.2} parent=0 // loop_footer
    %s13 = sadd.s32 1, %s9
  $region7: #{_stem_impl.2} parent=0 // loop_footer_branch
    %8 = sbr.rel target = $region3
  $region8: #{_stem_impl.2} parent=0 // loop_exit
    _

// kernel: _stem_impl.3
$region0: #{_stem_impl.3}
  #allocation0 [shape = 'u32[]', space=smem, size = 0x4, offset = 0x4, fixed_abs, tag = 'smem constant byte address 0x4 - core index']
  #allocation1 [shape = 'u32[144,128]{1,0:T(1,128)}', space=vmem, size = 0x12000, scoped, tag = 'internal scratch']
  %s0 = inlined_call_operand.vmem [shape: bf16[2,17,17,64], index: 0, kind: input, shape index: {}]
  %s1 = inlined_call_operand.vmem [shape: bf16[2,17,17,64], index: 1, kind: input, shape index: {}]
  %s2 = inlined_call_operand.vmem [shape: bf16[2,17,17,64], index: 2, kind: input, shape index: {}]
  %s3 = inlined_call_operand.vmem [shape: bf16[2,17,17,64], index: 3, kind: input, shape index: {}]
  %s4 = inlined_call_operand.hbm [shape: bf16[2,16,16,64], index: 4, kind: output, shape index: {}]
  %s5 = sld [smem:[#allocation0]]
  $region49: #{_stem_impl.3} parent=0
    _
  %s7 = ssub.s32 1, %s5
  %s8 = scalar_select 0, %s7, %s5
  $region1: #{_stem_impl.3} parent=0
    #allocation2 [shape = 'u8[131072]{0}', space=vmem, size = 0x20000, scoped, tag = 'output window, operand 0']
    #allocation3 [shape = 's32[2]{0}', space=sflag, size = 0x8, scoped, tag = 'scoped memory for _stem_impl.3']
    %9 = vsyncpa [#allocation3], 0
    %s10 = scalar_lea.sflag [#allocation3], 1
    %11 = vsyncpa %s10, 0
    loop: start=0, step=1, limit=4
    $region2: #{_stem_impl.3} parent=1 // loop_pre_header
      _
    $region3: #{_stem_impl.3} parent=1 // loop_header
      %s13 = sphi 0, %s17
      %p14 = scmp.ge.s32.totalorder %s13, 4
      %s23 = sphi 0, %s25
      %s26 = sphi 0, %s23
      %s27 = sphi 0, %s26
      %s43 = sphi 0, %s27
      %s49 = sphi 0, %s51
      %s52 = sphi 0, %s49
      %s53 = sphi 0, %s52
      %s69 = sphi 0, %s53
      %s75 = sphi 0, %s77
      %s78 = sphi 0, %s75
      %s79 = sphi 0, %s78
      %s95 = sphi 0, %s79
      %s101 = sphi 0, %s103
      %s104 = sphi 0, %s101
      %s105 = sphi 0, %s104
      %s121 = sphi 0, %s105
      %s127 = sphi 0, %s129
      %s130 = sphi 0, %s127
      %s131 = sphi 0, %s130
      %s147 = sphi 0, %s131
    $region4: #{_stem_impl.3} parent=1 // loop_header_branch
      %16 = sbr.rel (%p14) target = $region8
    $region5: #{_stem_impl.3} parent=1 // loop_body
      %s18 = ssub.s32 %s13, 1
      %s19 = ssub.s32 %s13, 2
      %s20 = sadd.s32 %s13, 1
      %s21 = ssub.s32 %s13, %s20
      %p22 = scmp.eq.s32.totalorder %s21, 0
      %s24 = sadd.s32 %s23, 1
      %s25 = scalar_select %p22, %s23, %s24
      %p28 = pneg %p22
      %p29 = scmp.eq.s32.totalorder %s13, 1
      %p30 = por %p28, %p29
      %p31 = scmp.ne.s32.totalorder %s23, %s26
      %p32 = scmp.eq.s32.totalorder %s13, 0
      %p33 = por %p31, %p32
      %p34 = scmp.ne.s32.totalorder %s23, %s26
      %p35 = scmp.eq.s32.totalorder %s18, 1
      %p36 = por %p34, %p35
      %p37 = scmp.ne.s32.totalorder %s26, %s27
      %p38 = scmp.eq.s32.totalorder %s18, 0
      %p39 = por %p37, %p38
      %p40 = scmp.ne.s32.totalorder %s26, %s27
      %p41 = scmp.eq.s32.totalorder %s19, 1
      %p42 = por %p40, %p41
      %p44 = scmp.ne.s32.totalorder %s27, %s43
      %p45 = scmp.eq.s32.totalorder %s19, 0
      %p46 = por %p44, %p45
      %s47 = ssub.s32 %s13, %s20
      %p48 = scmp.eq.s32.totalorder %s47, 0
      %s50 = sadd.s32 %s49, 1
      %s51 = scalar_select %p48, %s49, %s50
      %p54 = pneg %p48
      %p55 = scmp.eq.s32.totalorder %s13, 1
      %p56 = por %p54, %p55
      %p57 = scmp.ne.s32.totalorder %s49, %s52
      %p58 = scmp.eq.s32.totalorder %s13, 0
      %p59 = por %p57, %p58
      %p60 = scmp.ne.s32.totalorder %s49, %s52
      %p61 = scmp.eq.s32.totalorder %s18, 1
      %p62 = por %p60, %p61
      %p63 = scmp.ne.s32.totalorder %s52, %s53
      %p64 = scmp.eq.s32.totalorder %s18, 0
      %p65 = por %p63, %p64
      %p66 = scmp.ne.s32.totalorder %s52, %s53
      %p67 = scmp.eq.s32.totalorder %s19, 1
      %p68 = por %p66, %p67
      %p70 = scmp.ne.s32.totalorder %s53, %s69
      %p71 = scmp.eq.s32.totalorder %s19, 0
      %p72 = por %p70, %p71
      %s73 = ssub.s32 %s13, %s20
      %p74 = scmp.eq.s32.totalorder %s73, 0
      %s76 = sadd.s32 %s75, 1
      %s77 = scalar_select %p74, %s75, %s76
      %p80 = pneg %p74
      %p81 = scmp.eq.s32.totalorder %s13, 1
      %p82 = por %p80, %p81
      %p83 = scmp.ne.s32.totalorder %s75, %s78
      %p84 = scmp.eq.s32.totalorder %s13, 0
      %p85 = por %p83, %p84
      %p86 = scmp.ne.s32.totalorder %s75, %s78
      %p87 = scmp.eq.s32.totalorder %s18, 1
      %p88 = por %p86, %p87
      %p89 = scmp.ne.s32.totalorder %s78, %s79
      %p90 = scmp.eq.s32.totalorder %s18, 0
      %p91 = por %p89, %p90
      %p92 = scmp.ne.s32.totalorder %s78, %s79
      %p93 = scmp.eq.s32.totalorder %s19, 1
      %p94 = por %p92, %p93
      %p96 = scmp.ne.s32.totalorder %s79, %s95
      %p97 = scmp.eq.s32.totalorder %s19, 0
      %p98 = por %p96, %p97
      %s99 = ssub.s32 %s13, %s20
      %p100 = scmp.eq.s32.totalorder %s99, 0
      %s102 = sadd.s32 %s101, 1
      %s103 = scalar_select %p100, %s101, %s102
      %p106 = pneg %p100
      %p107 = scmp.eq.s32.totalorder %s13, 1
      %p108 = por %p106, %p107
      %p109 = scmp.ne.s32.totalorder %s101, %s104
      %p110 = scmp.eq.s32.totalorder %s13, 0
      %p111 = por %p109, %p110
      %p112 = scmp.ne.s32.totalorder %s101, %s104
      %p113 = scmp.eq.s32.totalorder %s18, 1
      %p114 = por %p112, %p113
      %p115 = scmp.ne.s32.totalorder %s104, %s105
      %p116 = scmp.eq.s32.totalorder %s18, 0
      %p117 = por %p115, %p116
      %p118 = scmp.ne.s32.totalorder %s104, %s105
      %p119 = scmp.eq.s32.totalorder %s19, 1
      %p120 = por %p118, %p119
      %p122 = scmp.ne.s32.totalorder %s105, %s121
      %p123 = scmp.eq.s32.totalorder %s19, 0
      %p124 = por %p122, %p123
      %s125 = ssub.s32 %s13, %s20
      %p126 = scmp.eq.s32.totalorder %s125, 0
      %s128 = sadd.s32 %s127, 1
      %s129 = scalar_select %p126, %s127, %s128
      %p132 = pneg %p126
      %p133 = scmp.eq.s32.totalorder %s13, 1
      %p134 = por %p132, %p133
      %p135 = scmp.ne.s32.totalorder %s127, %s130
      %p136 = scmp.eq.s32.totalorder %s13, 0
      %p137 = por %p135, %p136
      %p138 = scmp.ne.s32.totalorder %s127, %s130
      %p139 = scmp.eq.s32.totalorder %s18, 1
      %p140 = por %p138, %p139
      %p141 = scmp.ne.s32.totalorder %s130, %s131
      %p142 = scmp.eq.s32.totalorder %s18, 0
      %p143 = por %p141, %p142
      %p144 = scmp.ne.s32.totalorder %s130, %s131
      %p145 = scmp.eq.s32.totalorder %s19, 1
      %p146 = por %p144, %p145
      %p148 = scmp.ne.s32.totalorder %s131, %s147
      %p149 = scmp.eq.s32.totalorder %s19, 0
      %p150 = por %p148, %p149
      %p151 = scmp.le.s32.totalorder 1, %s13
      %p152 = scmp.lt.s32.totalorder %s13, 3
      %p153 = pnand %p151, %p152
      %p154 = pneg %p153
      // Predicated region
      $region9: #{_stem_impl.3} parent=5 // pred_check
        _
      $region10: #{_stem_impl.3} parent=5 // pred_check_branch
        %156 = sbr.rel (%p153) target = $region12
      $region11: #{_stem_impl.3} parent=5 // pred_region
        %s157 = ssub.s32 %s13, 1
      $region12: #{_stem_impl.3} parent=5 // pred_fallthru
        _
      %p158 = scmp.lt.s32.totalorder %s13, 2
      // Predicated region
      $region13: #{_stem_impl.3} parent=5 // pred_check
        %p159 = pneg %p158
      $region14: #{_stem_impl.3} parent=5 // pred_check_branch
        %161 = sbr.rel (%p159) target = $region16
      $region15: #{_stem_impl.3} parent=5 // pred_region
        // Predicated region
        $region17: #{_stem_impl.3} parent=15 // pred_check
          %p162 = pneg %p33
        $region18: #{_stem_impl.3} parent=15 // pred_check_branch
          %164 = sbr.rel (%p162) target = $region20
        $region19: #{_stem_impl.3} parent=15 // pred_region
          %p165 = scmp.lt.s32.totalorder %s13, 1
          %s166 = scalar_select %p165, %s13, 1
          %s167 = smul.addr %s166, 51
          %s168 = smul.addr %s167, 4
          %s169 = scalar_lea.vmem %s0, %s168
        $region20: #{_stem_impl.3} parent=15 // pred_fallthru
          _
        // Predicated region
        $region21: #{_stem_impl.3} parent=15 // pred_check
          %p170 = pneg %p59
        $region22: #{_stem_impl.3} parent=15 // pred_check_branch
          %172 = sbr.rel (%p170) target = $region24
        $region23: #{_stem_impl.3} parent=15 // pred_region
          %p173 = scmp.lt.s32.totalorder %s13, 1
          %s174 = scalar_select %p173, %s13, 1
          %s175 = smul.addr %s174, 51
          %s176 = smul.addr %s175, 4
          %s177 = scalar_lea.vmem %s1, %s176
        $region24: #{_stem_impl.3} parent=15 // pred_fallthru
          _
        // Predicated region
        $region25: #{_stem_impl.3} parent=15 // pred_check
          %p178 = pneg %p85
        $region26: #{_stem_impl.3} parent=15 // pred_check_branch
          %180 = sbr.rel (%p178) target = $region28
        $region27: #{_stem_impl.3} parent=15 // pred_region
          %p181 = scmp.lt.s32.totalorder %s13, 1
          %s182 = scalar_select %p181, %s13, 1
          %s183 = smul.addr %s182, 51
          %s184 = smul.addr %s183, 4
          %s185 = scalar_lea.vmem %s2, %s184
        $region28: #{_stem_impl.3} parent=15 // pred_fallthru
          _
        // Predicated region
        $region29: #{_stem_impl.3} parent=15 // pred_check
          %p186 = pneg %p111
        $region30: #{_stem_impl.3} parent=15 // pred_check_branch
          %188 = sbr.rel (%p186) target = $region32
        $region31: #{_stem_impl.3} parent=15 // pred_region
          %p189 = scmp.lt.s32.totalorder %s13, 1
          %s190 = scalar_select %p189, %s13, 1
          %s191 = smul.addr %s190, 51
          %s192 = smul.addr %s191, 4
          %s193 = scalar_lea.vmem %s3, %s192
        $region32: #{_stem_impl.3} parent=15 // pred_fallthru
          _
      $region16: #{_stem_impl.3} parent=5 // pred_fallthru
        _
      %p194 = scmp.le.s32.totalorder 1, %s13
      %p195 = scmp.lt.s32.totalorder %s13, 3
      %p196 = pnand %p194, %p195
      %p197 = pneg %p196
      // Predicated region
      $region33: #{_stem_impl.3} parent=5 // pred_check
        _
      $region34: #{_stem_impl.3} parent=5 // pred_check_branch
        %199 = sbr.rel (%p196) target = $region36
      $region35: #{_stem_impl.3} parent=5 // pred_region
        %s200 = ssub.s32 %s13, 1
        %p201 = scmp.lt.s32.totalorder %s18, 1
        %s202 = scalar_select %p201, %s18, 1
        %s203 = smul.addr %s202, 51
        %s204 = smul.addr %s203, 4
        %s205 = scalar_lea.vmem %s0, %s204
        %p206 = pneg %p39
        %p207 = pneg %p36
        %p208 = scmp.lt.s32.totalorder %s18, 1
        %s209 = scalar_select %p208, %s18, 1
        %s210 = smul.addr %s209, 51
        %s211 = smul.addr %s210, 4
        %s212 = scalar_lea.vmem %s1, %s211
        %p213 = pneg %p65
        %p214 = pneg %p62
        %p215 = scmp.lt.s32.totalorder %s18, 1
        %s216 = scalar_select %p215, %s18, 1
        %s217 = smul.addr %s216, 51
        %s218 = smul.addr %s217, 4
        %s219 = scalar_lea.vmem %s2, %s218
        %p220 = pneg %p91
        %p221 = pneg %p88
        %p222 = scmp.lt.s32.totalorder %s18, 1
        %s223 = scalar_select %p222, %s18, 1
        %s224 = smul.addr %s223, 51
        %s225 = smul.addr %s224, 4
        %s226 = scalar_lea.vmem %s3, %s225
        %p227 = pneg %p117
        %p228 = pneg %p114
        %p229 = pneg %p143
        %p230 = pneg %p140
        %s231 = sand.u32 %s130, 1
        %s232 = scalar_lea.sflag [#allocation3], %s231
        %s233 = sand.u32 %s130, 1
        %s234 = smul.addr %s233, 128
        %s235 = scalar_lea.vmem [#allocation2], %s234
        %p236 = scmp.lt.s32.totalorder %s18, 1
        %s237 = scalar_select %p236, %s18, 1
        %s238 = smul.addr %s237, 51
        %s239 = smul.addr %s238, 4
        %s240 = scalar_lea.vmem %s0, %s239
        %p241 = scmp.lt.s32.totalorder %s18, 1
        %s242 = scalar_select %p241, %s18, 1
        %s243 = smul.addr %s242, 51
        %s244 = smul.addr %s243, 4
        %s245 = scalar_lea.vmem %s1, %s244
        %p246 = scmp.lt.s32.totalorder %s18, 1
        %s247 = scalar_select %p246, %s18, 1
        %s248 = smul.addr %s247, 51
        %s249 = smul.addr %s248, 4
        %s250 = scalar_lea.vmem %s2, %s249
        %p251 = scmp.lt.s32.totalorder %s18, 1
        %s252 = scalar_select %p251, %s18, 1
        %s253 = smul.addr %s252, 51
        %s254 = smul.addr %s253, 4
        %s255 = scalar_lea.vmem %s3, %s254
        %v256 = vld [vmem:[%s240] sm:$0xf]
        %v257 = vld [vmem:[%s240 + $0x4] sm:$0xf]
        %v258 = vld [vmem:[%s240 + $0xc] sm:$0xf]
        %v259 = vld [vmem:[%s240 + $0x10] sm:$0xf]
        %v260 = vld [vmem:[%s240 + $0x18] sm:$0xf]
        %v261 = vld [vmem:[%s240 + $0x1c] sm:$0xf]
        %v262 = vld [vmem:[%s240 + $0x24] sm:$0xf]
        %v263 = vld [vmem:[%s240 + $0x28] sm:$0xf]
        %v264 = vld [vmem:[%s240 + $0x30] sm:$0xf]
        %v265 = vld [vmem:[%s240 + $0x34] sm:$0xf]
        %v266 = vld [vmem:[%s240 + $0x3c] sm:$0xf]
        %v267 = vld [vmem:[%s240 + $0x40] sm:$0xf]
        %v268 = vld [vmem:[%s240 + $0x48] sm:$0xf]
        %v269 = vld [vmem:[%s240 + $0x4c] sm:$0xf]
        %v270 = vld [vmem:[%s240 + $0x54] sm:$0xf]
        %v271 = vld [vmem:[%s240 + $0x58] sm:$0xf]
        %v272 = vld [vmem:[%s240 + $0x60] sm:$0xf]
        %v273 = vld [vmem:[%s240 + $0x64] sm:$0xf]
        %v274 = vld [vmem:[%s240 + $0x6c] sm:$0xf]
        %v275 = vld [vmem:[%s240 + $0x70] sm:$0xf]
        %v276 = vld [vmem:[%s240 + $0x78] sm:$0xf]
        %v277 = vld [vmem:[%s240 + $0x7c] sm:$0xf]
        %v278 = vld [vmem:[%s240 + $0x84] sm:$0xf]
        %v279 = vld [vmem:[%s240 + $0x88] sm:$0xf]
        %v280 = vld [vmem:[%s240 + $0x90] sm:$0xf]
        %v281 = vld [vmem:[%s240 + $0x94] sm:$0xf]
        %v282 = vld [vmem:[%s240 + $0x9c] sm:$0xf]
        %v283 = vld [vmem:[%s240 + $0xa0] sm:$0xf]
        %v284 = vld [vmem:[%s240 + $0xa8] sm:$0xf]
        %v285 = vld [vmem:[%s240 + $0xac] sm:$0xf]
        %v286 = vld [vmem:[%s240 + $0xb4] sm:$0xf]
        %v287 = vld [vmem:[%s240 + $0xb8] sm:$0xf]
        %v288 = vld [vmem:[%s240 + $0x8] sm:$0x1]
        %v289 = vld [vmem:[%s240 + $0x14] sm:$0x1]
        %v290 = vld [vmem:[%s240 + $0x20] sm:$0x1]
        %v291 = vld [vmem:[%s240 + $0x2c] sm:$0x1]
        %v292 = vld [vmem:[%s240 + $0x38] sm:$0x1]
        %v293 = vld [vmem:[%s240 + $0x44] sm:$0x1]
        %v294 = vld [vmem:[%s240 + $0x50] sm:$0x1]
        %v295 = vld [vmem:[%s240 + $0x5c] sm:$0x1]
        %v296 = vld [vmem:[%s240 + $0x68] sm:$0x1]
        %v297 = vld [vmem:[%s240 + $0x74] sm:$0x1]
        %v298 = vld [vmem:[%s240 + $0x80] sm:$0x1]
        %v299 = vld [vmem:[%s240 + $0x8c] sm:$0x1]
        %v300 = vld [vmem:[%s240 + $0x98] sm:$0x1]
        %v301 = vld [vmem:[%s240 + $0xa4] sm:$0x1]
        %v302 = vld [vmem:[%s240 + $0xb0] sm:$0x1]
        %v303 = vld [vmem:[%s240 + $0xbc] sm:$0x1]
        %vm304 = vsmask.f32 3328
        %vm305 = vsmask.f32 7440
        %vm306 = vmor %vm304, %vm305
        %v308 = vshrl.u32 %v256, 16
        %v310 = vrot.slane %v308, 4
        %v311 = vshll.u32 %v256, 16
        %v313 = vrot.slane %v311, 5
        %v314 = vor.u32 %v310, %v313
        %v315 = vrot.slane %v314, 4
        %v317 = vshll.u32 %v257, 16
        %v319 = vrot.slane %v317, 5
        %v320 = vsel %vm306, %v315, %v319
        %v321 = vshrl.u32 %v257, 16
        %v323 = vrot.slane %v321, 4
        %v324 = vor.u32 %v323, %v319
        %v325 = vrot.slane %v324, 4
        %v327 = vshll.u32 %v288, 16
        %v329 = vrot.slane %v327, 5
        %v330 = vsel %vm306, %v325, %v329
        %v332 = vshrl.u32 %v258, 16
        %v334 = vrot.slane %v332, 4
        %v335 = vshll.u32 %v258, 16
        %v337 = vrot.slane %v335, 5
        %v338 = vor.u32 %v334, %v337
        %v339 = vrot.slane %v338, 4
        %v341 = vshll.u32 %v259, 16
        %v343 = vrot.slane %v341, 5
        %v344 = vsel %vm306, %v339, %v343
        %v345 = vshrl.u32 %v259, 16
        %v347 = vrot.slane %v345, 4
        %v348 = vor.u32 %v347, %v343
        %v349 = vrot.slane %v348, 4
        %v351 = vshll.u32 %v289, 16
        %v353 = vrot.slane %v351, 5
        %v354 = vsel %vm306, %v349, %v353
        %v356 = vshrl.u32 %v260, 16
        %v358 = vrot.slane %v356, 4
        %v359 = vshll.u32 %v260, 16
        %v361 = vrot.slane %v359, 5
        %v362 = vor.u32 %v358, %v361
        %v363 = vrot.slane %v362, 4
        %v365 = vshll.u32 %v261, 16
        %v367 = vrot.slane %v365, 5
        %v368 = vsel %vm306, %v363, %v367
        %v369 = vshrl.u32 %v261, 16
        %v371 = vrot.slane %v369, 4
        %v372 = vor.u32 %v371, %v367
        %v373 = vrot.slane %v372, 4
        %v375 = vshll.u32 %v290, 16
        %v377 = vrot.slane %v375, 5
        %v378 = vsel %vm306, %v373, %v377
        %v380 = vshrl.u32 %v262, 16
        %v382 = vrot.slane %v380, 4
        %v383 = vshll.u32 %v262, 16
        %v385 = vrot.slane %v383, 5
        %v386 = vor.u32 %v382, %v385
        %v387 = vrot.slane %v386, 4
        %v389 = vshll.u32 %v263, 16
        %v391 = vrot.slane %v389, 5
        %v392 = vsel %vm306, %v387, %v391
        %v393 = vshrl.u32 %v263, 16
        %v395 = vrot.slane %v393, 4
        %v396 = vor.u32 %v395, %v391
        %v397 = vrot.slane %v396, 4
        %v399 = vshll.u32 %v291, 16
        %v401 = vrot.slane %v399, 5
        %v402 = vsel %vm306, %v397, %v401
        %v404 = vshrl.u32 %v264, 16
        %v406 = vrot.slane %v404, 4
        %v407 = vshll.u32 %v264, 16
        %v409 = vrot.slane %v407, 5
        %v410 = vor.u32 %v406, %v409
        %v411 = vrot.slane %v410, 4
        %v413 = vshll.u32 %v265, 16
        %v415 = vrot.slane %v413, 5
        %v416 = vsel %vm306, %v411, %v415
        %v417 = vshrl.u32 %v265, 16
        %v419 = vrot.slane %v417, 4
        %v420 = vor.u32 %v419, %v415
        %v421 = vrot.slane %v420, 4
        %v423 = vshll.u32 %v292, 16
        %v425 = vrot.slane %v423, 5
        %v426 = vsel %vm306, %v421, %v425
        %v428 = vshrl.u32 %v266, 16
        %v430 = vrot.slane %v428, 4
        %v431 = vshll.u32 %v266, 16
        %v433 = vrot.slane %v431, 5
        %v434 = vor.u32 %v430, %v433
        %v435 = vrot.slane %v434, 4
        %v437 = vshll.u32 %v267, 16
        %v439 = vrot.slane %v437, 5
        %v440 = vsel %vm306, %v435, %v439
        %v441 = vshrl.u32 %v267, 16
        %v443 = vrot.slane %v441, 4
        %v444 = vor.u32 %v443, %v439
        %v445 = vrot.slane %v444, 4
        %v447 = vshll.u32 %v293, 16
        %v449 = vrot.slane %v447, 5
        %v450 = vsel %vm306, %v445, %v449
        %v452 = vshrl.u32 %v268, 16
        %v454 = vrot.slane %v452, 4
        %v455 = vshll.u32 %v268, 16
        %v457 = vrot.slane %v455, 5
        %v458 = vor.u32 %v454, %v457
        %v459 = vrot.slane %v458, 4
        %v461 = vshll.u32 %v269, 16
        %v463 = vrot.slane %v461, 5
        %v464 = vsel %vm306, %v459, %v463
        %v465 = vshrl.u32 %v269, 16
        %v467 = vrot.slane %v465, 4
        %v468 = vor.u32 %v467, %v463
        %v469 = vrot.slane %v468, 4
        %v471 = vshll.u32 %v294, 16
        %v473 = vrot.slane %v471, 5
        %v474 = vsel %vm306, %v469, %v473
        %v476 = vshrl.u32 %v270, 16
        %v478 = vrot.slane %v476, 4
        %v479 = vshll.u32 %v270, 16
        %v481 = vrot.slane %v479, 5
        %v482 = vor.u32 %v478, %v481
        %v483 = vrot.slane %v482, 4
        %v485 = vshll.u32 %v271, 16
        %v487 = vrot.slane %v485, 5
        %v488 = vsel %vm306, %v483, %v487
        %v489 = vshrl.u32 %v271, 16
        %v491 = vrot.slane %v489, 4
        %v492 = vor.u32 %v491, %v487
        %v493 = vrot.slane %v492, 4
        %v495 = vshll.u32 %v295, 16
        %v497 = vrot.slane %v495, 5
        %v498 = vsel %vm306, %v493, %v497
        %v500 = vshrl.u32 %v272, 16
        %v502 = vrot.slane %v500, 4
        %v503 = vshll.u32 %v272, 16
        %v505 = vrot.slane %v503, 5
        %v506 = vor.u32 %v502, %v505
        %v507 = vrot.slane %v506, 4
        %v509 = vshll.u32 %v273, 16
        %v511 = vrot.slane %v509, 5
        %v512 = vsel %vm306, %v507, %v511
        %v513 = vshrl.u32 %v273, 16
        %v515 = vrot.slane %v513, 4
        %v516 = vor.u32 %v515, %v511
        %v517 = vrot.slane %v516, 4
        %v519 = vshll.u32 %v296, 16
        %v521 = vrot.slane %v519, 5
        %v522 = vsel %vm306, %v517, %v521
        %v524 = vshrl.u32 %v274, 16
        %v526 = vrot.slane %v524, 4
        %v527 = vshll.u32 %v274, 16
        %v529 = vrot.slane %v527, 5
        %v530 = vor.u32 %v526, %v529
        %v531 = vrot.slane %v530, 4
        %v533 = vshll.u32 %v275, 16
        %v535 = vrot.slane %v533, 5
        %v536 = vsel %vm306, %v531, %v535
        %v537 = vshrl.u32 %v275, 16
        %v539 = vrot.slane %v537, 4
        %v540 = vor.u32 %v539, %v535
        %v541 = vrot.slane %v540, 4
        %v543 = vshll.u32 %v297, 16
        %v545 = vrot.slane %v543, 5
        %v546 = vsel %vm306, %v541, %v545
        %v548 = vshrl.u32 %v276, 16
        %v550 = vrot.slane %v548, 4
        %v551 = vshll.u32 %v276, 16
        %v553 = vrot.slane %v551, 5
        %v554 = vor.u32 %v550, %v553
        %v555 = vrot.slane %v554, 4
        %v557 = vshll.u32 %v277, 16
        %v559 = vrot.slane %v557, 5
        %v560 = vsel %vm306, %v555, %v559
        %v561 = vshrl.u32 %v277, 16
        %v563 = vrot.slane %v561, 4
        %v564 = vor.u32 %v563, %v559
        %v565 = vrot.slane %v564, 4
        %v567 = vshll.u32 %v298, 16
        %v569 = vrot.slane %v567, 5
        %v570 = vsel %vm306, %v565, %v569
        %v572 = vshrl.u32 %v278, 16
        %v574 = vrot.slane %v572, 4
        %v575 = vshll.u32 %v278, 16
        %v577 = vrot.slane %v575, 5
        %v578 = vor.u32 %v574, %v577
        %v579 = vrot.slane %v578, 4
        %v581 = vshll.u32 %v279, 16
        %v583 = vrot.slane %v581, 5
        %v584 = vsel %vm306, %v579, %v583
        %v585 = vshrl.u32 %v279, 16
        %v587 = vrot.slane %v585, 4
        %v588 = vor.u32 %v587, %v583
        %v589 = vrot.slane %v588, 4
        %v591 = vshll.u32 %v299, 16
        %v593 = vrot.slane %v591, 5
        %v594 = vsel %vm306, %v589, %v593
        %v596 = vshrl.u32 %v280, 16
        %v598 = vrot.slane %v596, 4
        %v599 = vshll.u32 %v280, 16
        %v601 = vrot.slane %v599, 5
        %v602 = vor.u32 %v598, %v601
        %v603 = vrot.slane %v602, 4
        %v605 = vshll.u32 %v281, 16
        %v607 = vrot.slane %v605, 5
        %v608 = vsel %vm306, %v603, %v607
        %v609 = vshrl.u32 %v281, 16
        %v611 = vrot.slane %v609, 4
        %v612 = vor.u32 %v611, %v607
        %v613 = vrot.slane %v612, 4
        %v615 = vshll.u32 %v300, 16
        %v617 = vrot.slane %v615, 5
        %v618 = vsel %vm306, %v613, %v617
        %v620 = vshrl.u32 %v282, 16
        %v622 = vrot.slane %v620, 4
        %v623 = vshll.u32 %v282, 16
        %v625 = vrot.slane %v623, 5
        %v626 = vor.u32 %v622, %v625
        %v627 = vrot.slane %v626, 4
        %v629 = vshll.u32 %v283, 16
        %v631 = vrot.slane %v629, 5
        %v632 = vsel %vm306, %v627, %v631
        %v633 = vshrl.u32 %v283, 16
        %v635 = vrot.slane %v633, 4
        %v636 = vor.u32 %v635, %v631
        %v637 = vrot.slane %v636, 4
        %v639 = vshll.u32 %v301, 16
        %v641 = vrot.slane %v639, 5
        %v642 = vsel %vm306, %v637, %v641
        %v644 = vshrl.u32 %v284, 16
        %v646 = vrot.slane %v644, 4
        %v647 = vshll.u32 %v284, 16
        %v649 = vrot.slane %v647, 5
        %v650 = vor.u32 %v646, %v649
        %v651 = vrot.slane %v650, 4
        %v653 = vshll.u32 %v285, 16
        %v655 = vrot.slane %v653, 5
        %v656 = vsel %vm306, %v651, %v655
        %v657 = vshrl.u32 %v285, 16
        %v659 = vrot.slane %v657, 4
        %v660 = vor.u32 %v659, %v655
        %v661 = vrot.slane %v660, 4
        %v663 = vshll.u32 %v302, 16
        %v665 = vrot.slane %v663, 5
        %v666 = vsel %vm306, %v661, %v665
        %v668 = vshrl.u32 %v286, 16
        %v670 = vrot.slane %v668, 4
        %v671 = vshll.u32 %v286, 16
        %v673 = vrot.slane %v671, 5
        %v674 = vor.u32 %v670, %v673
        %v675 = vrot.slane %v674, 4
        %v677 = vshll.u32 %v287, 16
        %v679 = vrot.slane %v677, 5
        %v680 = vsel %vm306, %v675, %v679
        %v681 = vshrl.u32 %v287, 16
        %v683 = vrot.slane %v681, 4
        %v684 = vor.u32 %v683, %v679
        %v685 = vrot.slane %v684, 4
        %v687 = vshll.u32 %v303, 16
        %v689 = vrot.slane %v687, 5
        %v690 = vsel %vm306, %v685, %v689
        %v723 = vmax.bf16 %v256, %v320
        %v724 = vmax.bf16 %v257, %v330
        %v725 = vmax.bf16 %v258, %v344
        %v726 = vmax.bf16 %v259, %v354
        %v727 = vmax.bf16 %v260, %v368
        %v728 = vmax.bf16 %v261, %v378
        %v729 = vmax.bf16 %v262, %v392
        %v730 = vmax.bf16 %v263, %v402
        %v731 = vmax.bf16 %v264, %v416
        %v732 = vmax.bf16 %v265, %v426
        %v733 = vmax.bf16 %v266, %v440
        %v734 = vmax.bf16 %v267, %v450
        %v735 = vmax.bf16 %v268, %v464
        %v736 = vmax.bf16 %v269, %v474
        %v737 = vmax.bf16 %v270, %v488
        %v738 = vmax.bf16 %v271, %v498
        %v739 = vmax.bf16 %v272, %v512
        %v740 = vmax.bf16 %v273, %v522
        %v741 = vmax.bf16 %v274, %v536
        %v742 = vmax.bf16 %v275, %v546
        %v743 = vmax.bf16 %v276, %v560
        %v744 = vmax.bf16 %v277, %v570
        %v745 = vmax.bf16 %v278, %v584
        %v746 = vmax.bf16 %v279, %v594
        %v747 = vmax.bf16 %v280, %v608
        %v748 = vmax.bf16 %v281, %v618
        %v749 = vmax.bf16 %v282, %v632
        %v750 = vmax.bf16 %v283, %v642
        %v751 = vmax.bf16 %v284, %v656
        %v752 = vmax.bf16 %v285, %v666
        %v753 = vmax.bf16 %v286, %v680
        %v754 = vmax.bf16 %v287, %v690
        %s755 = scalar_lea.vmem %s240, 12
        %v756 = vld [vmem:[%s755] sm:$0xf]
        %v757 = vld [vmem:[%s755 + $0x4] sm:$0xf]
        %v758 = vld [vmem:[%s755 + $0xc] sm:$0xf]
        %v759 = vld [vmem:[%s755 + $0x10] sm:$0xf]
        %v760 = vld [vmem:[%s755 + $0x18] sm:$0xf]
        %v761 = vld [vmem:[%s755 + $0x1c] sm:$0xf]
        %v762 = vld [vmem:[%s755 + $0x24] sm:$0xf]
        %v763 = vld [vmem:[%s755 + $0x28] sm:$0xf]
        %v764 = vld [vmem:[%s755 + $0x30] sm:$0xf]
        %v765 = vld [vmem:[%s755 + $0x34] sm:$0xf]
        %v766 = vld [vmem:[%s755 + $0x3c] sm:$0xf]
        %v767 = vld [vmem:[%s755 + $0x40] sm:$0xf]
        %v768 = vld [vmem:[%s755 + $0x48] sm:$0xf]
        %v769 = vld [vmem:[%s755 + $0x4c] sm:$0xf]
        %v770 = vld [vmem:[%s755 + $0x54] sm:$0xf]
        %v771 = vld [vmem:[%s755 + $0x58] sm:$0xf]
        %v772 = vld [vmem:[%s755 + $0x60] sm:$0xf]
        %v773 = vld [vmem:[%s755 + $0x64] sm:$0xf]
        %v774 = vld [vmem:[%s755 + $0x6c] sm:$0xf]
        %v775 = vld [vmem:[%s755 + $0x70] sm:$0xf]
        %v776 = vld [vmem:[%s755 + $0x78] sm:$0xf]
        %v777 = vld [vmem:[%s755 + $0x7c] sm:$0xf]
        %v778 = vld [vmem:[%s755 + $0x84] sm:$0xf]
        %v779 = vld [vmem:[%s755 + $0x88] sm:$0xf]
        %v780 = vld [vmem:[%s755 + $0x90] sm:$0xf]
        %v781 = vld [vmem:[%s755 + $0x94] sm:$0xf]
        %v782 = vld [vmem:[%s755 + $0x9c] sm:$0xf]
        %v783 = vld [vmem:[%s755 + $0xa0] sm:$0xf]
        %v784 = vld [vmem:[%s755 + $0xa8] sm:$0xf]
        %v785 = vld [vmem:[%s755 + $0xac] sm:$0xf]
        %v786 = vld [vmem:[%s755 + $0xb4] sm:$0xf]
        %v787 = vld [vmem:[%s755 + $0xb8] sm:$0xf]
        %v788 = vmax.bf16 %v723, %v756
        %v789 = vmax.bf16 %v724, %v757
        %v790 = vmax.bf16 %v725, %v758
        %v791 = vmax.bf16 %v726, %v759
        %v792 = vmax.bf16 %v727, %v760
        %v793 = vmax.bf16 %v728, %v761
        %v794 = vmax.bf16 %v729, %v762
        %v795 = vmax.bf16 %v730, %v763
        %v796 = vmax.bf16 %v731, %v764
        %v797 = vmax.bf16 %v732, %v765
        %v798 = vmax.bf16 %v733, %v766
        %v799 = vmax.bf16 %v734, %v767
        %v800 = vmax.bf16 %v735, %v768
        %v801 = vmax.bf16 %v736, %v769
        %v802 = vmax.bf16 %v737, %v770
        %v803 = vmax.bf16 %v738, %v771
        %v804 = vmax.bf16 %v739, %v772
        %v805 = vmax.bf16 %v740, %v773
        %v806 = vmax.bf16 %v741, %v774
        %v807 = vmax.bf16 %v742, %v775
        %v808 = vmax.bf16 %v743, %v776
        %v809 = vmax.bf16 %v744, %v777
        %v810 = vmax.bf16 %v745, %v778
        %v811 = vmax.bf16 %v746, %v779
        %v812 = vmax.bf16 %v747, %v780
        %v813 = vmax.bf16 %v748, %v781
        %v814 = vmax.bf16 %v749, %v782
        %v815 = vmax.bf16 %v750, %v783
        %v816 = vmax.bf16 %v751, %v784
        %v817 = vmax.bf16 %v752, %v785
        %v818 = vmax.bf16 %v753, %v786
        %v819 = vmax.bf16 %v754, %v787
        %v820 = vld [vmem:[%s755 + $0x8] sm:$0x1]
        %v821 = vld [vmem:[%s755 + $0x14] sm:$0x1]
        %v822 = vld [vmem:[%s755 + $0x20] sm:$0x1]
        %v823 = vld [vmem:[%s755 + $0x2c] sm:$0x1]
        %v824 = vld [vmem:[%s755 + $0x38] sm:$0x1]
        %v825 = vld [vmem:[%s755 + $0x44] sm:$0x1]
        %v826 = vld [vmem:[%s755 + $0x50] sm:$0x1]
        %v827 = vld [vmem:[%s755 + $0x5c] sm:$0x1]
        %v828 = vld [vmem:[%s755 + $0x68] sm:$0x1]
        %v829 = vld [vmem:[%s755 + $0x74] sm:$0x1]
        %v830 = vld [vmem:[%s755 + $0x80] sm:$0x1]
        %v831 = vld [vmem:[%s755 + $0x8c] sm:$0x1]
        %v832 = vld [vmem:[%s755 + $0x98] sm:$0x1]
        %v833 = vld [vmem:[%s755 + $0xa4] sm:$0x1]
        %v834 = vld [vmem:[%s755 + $0xb0] sm:$0x1]
        %v835 = vld [vmem:[%s755 + $0xbc] sm:$0x1]
        %v837 = vshrl.u32 %v756, 16
        %v839 = vrot.slane %v837, 4
        %v840 = vshll.u32 %v756, 16
        %v842 = vrot.slane %v840, 5
        %v843 = vor.u32 %v839, %v842
        %v844 = vrot.slane %v843, 4
        %v846 = vshll.u32 %v757, 16
        %v848 = vrot.slane %v846, 5
        %v849 = vsel %vm306, %v844, %v848
        %v850 = vshrl.u32 %v757, 16
        %v852 = vrot.slane %v850, 4
        %v853 = vor.u32 %v852, %v848
        %v854 = vrot.slane %v853, 4
        %v856 = vshll.u32 %v820, 16
        %v858 = vrot.slane %v856, 5
        %v859 = vsel %vm306, %v854, %v858
        %v861 = vshrl.u32 %v758, 16
        %v863 = vrot.slane %v861, 4
        %v864 = vshll.u32 %v758, 16
        %v866 = vrot.slane %v864, 5
        %v867 = vor.u32 %v863, %v866
        %v868 = vrot.slane %v867, 4
        %v870 = vshll.u32 %v759, 16
        %v872 = vrot.slane %v870, 5
        %v873 = vsel %vm306, %v868, %v872
        %v874 = vshrl.u32 %v759, 16
        %v876 = vrot.slane %v874, 4
        %v877 = vor.u32 %v876, %v872
        %v878 = vrot.slane %v877, 4
        %v880 = vshll.u32 %v821, 16
        %v882 = vrot.slane %v880, 5
        %v883 = vsel %vm306, %v878, %v882
        %v885 = vshrl.u32 %v760, 16
        %v887 = vrot.slane %v885, 4
        %v888 = vshll.u32 %v760, 16
        %v890 = vrot.slane %v888, 5
        %v891 = vor.u32 %v887, %v890
        %v892 = vrot.slane %v891, 4
        %v894 = vshll.u32 %v761, 16
        %v896 = vrot.slane %v894, 5
        %v897 = vsel %vm306, %v892, %v896
        %v898 = vshrl.u32 %v761, 16
        %v900 = vrot.slane %v898, 4
        %v901 = vor.u32 %v900, %v896
        %v902 = vrot.slane %v901, 4
        %v904 = vshll.u32 %v822, 16
        %v906 = vrot.slane %v904, 5
        %v907 = vsel %vm306, %v902, %v906
        %v909 = vshrl.u32 %v762, 16
        %v911 = vrot.slane %v909, 4
        %v912 = vshll.u32 %v762, 16
        %v914 = vrot.slane %v912, 5
        %v915 = vor.u32 %v911, %v914
        %v916 = vrot.slane %v915, 4
        %v918 = vshll.u32 %v763, 16
        %v920 = vrot.slane %v918, 5
        %v921 = vsel %vm306, %v916, %v920
        %v922 = vshrl.u32 %v763, 16
        %v924 = vrot.slane %v922, 4
        %v925 = vor.u32 %v924, %v920
        %v926 = vrot.slane %v925, 4
        %v928 = vshll.u32 %v823, 16
        %v930 = vrot.slane %v928, 5
        %v931 = vsel %vm306, %v926, %v930
        %v933 = vshrl.u32 %v764, 16
        %v935 = vrot.slane %v933, 4
        %v936 = vshll.u32 %v764, 16
        %v938 = vrot.slane %v936, 5
        %v939 = vor.u32 %v935, %v938
        %v940 = vrot.slane %v939, 4
        %v942 = vshll.u32 %v765, 16
        %v944 = vrot.slane %v942, 5
        %v945 = vsel %vm306, %v940, %v944
        %v946 = vshrl.u32 %v765, 16
        %v948 = vrot.slane %v946, 4
        %v949 = vor.u32 %v948, %v944
        %v950 = vrot.slane %v949, 4
        %v952 = vshll.u32 %v824, 16
        %v954 = vrot.slane %v952, 5
        %v955 = vsel %vm306, %v950, %v954
        %v957 = vshrl.u32 %v766, 16
        %v959 = vrot.slane %v957, 4
        %v960 = vshll.u32 %v766, 16
        %v962 = vrot.slane %v960, 5
        %v963 = vor.u32 %v959, %v962
        %v964 = vrot.slane %v963, 4
        %v966 = vshll.u32 %v767, 16
        %v968 = vrot.slane %v966, 5
        %v969 = vsel %vm306, %v964, %v968
        %v970 = vshrl.u32 %v767, 16
        %v972 = vrot.slane %v970, 4
        %v973 = vor.u32 %v972, %v968
        %v974 = vrot.slane %v973, 4
        %v976 = vshll.u32 %v825, 16
        %v978 = vrot.slane %v976, 5
        %v979 = vsel %vm306, %v974, %v978
        %v981 = vshrl.u32 %v768, 16
        %v983 = vrot.slane %v981, 4
        %v984 = vshll.u32 %v768, 16
        %v986 = vrot.slane %v984, 5
        %v987 = vor.u32 %v983, %v986
        %v988 = vrot.slane %v987, 4
        %v990 = vshll.u32 %v769, 16
        %v992 = vrot.slane %v990, 5
        %v993 = vsel %vm306, %v988, %v992
        %v994 = vshrl.u32 %v769, 16
        %v996 = vrot.slane %v994, 4
        %v997 = vor.u32 %v996, %v992
        %v998 = vrot.slane %v997, 4
        %v1000 = vshll.u32 %v826, 16
        %v1002 = vrot.slane %v1000, 5
        %v1003 = vsel %vm306, %v998, %v1002
        %v1005 = vshrl.u32 %v770, 16
        %v1007 = vrot.slane %v1005, 4
        %v1008 = vshll.u32 %v770, 16
        %v1010 = vrot.slane %v1008, 5
        %v1011 = vor.u32 %v1007, %v1010
        %v1012 = vrot.slane %v1011, 4
        %v1014 = vshll.u32 %v771, 16
        %v1016 = vrot.slane %v1014, 5
        %v1017 = vsel %vm306, %v1012, %v1016
        %v1018 = vshrl.u32 %v771, 16
        %v1020 = vrot.slane %v1018, 4
        %v1021 = vor.u32 %v1020, %v1016
        %v1022 = vrot.slane %v1021, 4
        %v1024 = vshll.u32 %v827, 16
        %v1026 = vrot.slane %v1024, 5
        %v1027 = vsel %vm306, %v1022, %v1026
        %v1029 = vshrl.u32 %v772, 16
        %v1031 = vrot.slane %v1029, 4
        %v1032 = vshll.u32 %v772, 16
        %v1034 = vrot.slane %v1032, 5
        %v1035 = vor.u32 %v1031, %v1034
        %v1036 = vrot.slane %v1035, 4
        %v1038 = vshll.u32 %v773, 16
        %v1040 = vrot.slane %v1038, 5
        %v1041 = vsel %vm306, %v1036, %v1040
        %v1042 = vshrl.u32 %v773, 16
        %v1044 = vrot.slane %v1042, 4
        %v1045 = vor.u32 %v1044, %v1040
        %v1046 = vrot.slane %v1045, 4
        %v1048 = vshll.u32 %v828, 16
        %v1050 = vrot.slane %v1048, 5
        %v1051 = vsel %vm306, %v1046, %v1050
        %v1053 = vshrl.u32 %v774, 16
        %v1055 = vrot.slane %v1053, 4
        %v1056 = vshll.u32 %v774, 16
        %v1058 = vrot.slane %v1056, 5
        %v1059 = vor.u32 %v1055, %v1058
        %v1060 = vrot.slane %v1059, 4
        %v1062 = vshll.u32 %v775, 16
        %v1064 = vrot.slane %v1062, 5
        %v1065 = vsel %vm306, %v1060, %v1064
        %v1066 = vshrl.u32 %v775, 16
        %v1068 = vrot.slane %v1066, 4
        %v1069 = vor.u32 %v1068, %v1064
        %v1070 = vrot.slane %v1069, 4
        %v1072 = vshll.u32 %v829, 16
        %v1074 = vrot.slane %v1072, 5
        %v1075 = vsel %vm306, %v1070, %v1074
        %v1077 = vshrl.u32 %v776, 16
        %v1079 = vrot.slane %v1077, 4
        %v1080 = vshll.u32 %v776, 16
        %v1082 = vrot.slane %v1080, 5
        %v1083 = vor.u32 %v1079, %v1082
        %v1084 = vrot.slane %v1083, 4
        %v1086 = vshll.u32 %v777, 16
        %v1088 = vrot.slane %v1086, 5
        %v1089 = vsel %vm306, %v1084, %v1088
        %v1090 = vshrl.u32 %v777, 16
        %v1092 = vrot.slane %v1090, 4
        %v1093 = vor.u32 %v1092, %v1088
        %v1094 = vrot.slane %v1093, 4
        %v1096 = vshll.u32 %v830, 16
        %v1098 = vrot.slane %v1096, 5
        %v1099 = vsel %vm306, %v1094, %v1098
        %v1101 = vshrl.u32 %v778, 16
        %v1103 = vrot.slane %v1101, 4
        %v1104 = vshll.u32 %v778, 16
        %v1106 = vrot.slane %v1104, 5
        %v1107 = vor.u32 %v1103, %v1106
        %v1108 = vrot.slane %v1107, 4
        %v1110 = vshll.u32 %v779, 16
        %v1112 = vrot.slane %v1110, 5
        %v1113 = vsel %vm306, %v1108, %v1112
        %v1114 = vshrl.u32 %v779, 16
        %v1116 = vrot.slane %v1114, 4
        %v1117 = vor.u32 %v1116, %v1112
        %v1118 = vrot.slane %v1117, 4
        %v1120 = vshll.u32 %v831, 16
        %v1122 = vrot.slane %v1120, 5
        %v1123 = vsel %vm306, %v1118, %v1122
        %v1125 = vshrl.u32 %v780, 16
        %v1127 = vrot.slane %v1125, 4
        %v1128 = vshll.u32 %v780, 16
        %v1130 = vrot.slane %v1128, 5
        %v1131 = vor.u32 %v1127, %v1130
        %v1132 = vrot.slane %v1131, 4
        %v1134 = vshll.u32 %v781, 16
        %v1136 = vrot.slane %v1134, 5
        %v1137 = vsel %vm306, %v1132, %v1136
        %v1138 = vshrl.u32 %v781, 16
        %v1140 = vrot.slane %v1138, 4
        %v1141 = vor.u32 %v1140, %v1136
        %v1142 = vrot.slane %v1141, 4
        %v1144 = vshll.u32 %v832, 16
        %v1146 = vrot.slane %v1144, 5
        %v1147 = vsel %vm306, %v1142, %v1146
        %v1149 = vshrl.u32 %v782, 16
        %v1151 = vrot.slane %v1149, 4
        %v1152 = vshll.u32 %v782, 16
        %v1154 = vrot.slane %v1152, 5
        %v1155 = vor.u32 %v1151, %v1154
        %v1156 = vrot.slane %v1155, 4
        %v1158 = vshll.u32 %v783, 16
        %v1160 = vrot.slane %v1158, 5
        %v1161 = vsel %vm306, %v1156, %v1160
        %v1162 = vshrl.u32 %v783, 16
        %v1164 = vrot.slane %v1162, 4
        %v1165 = vor.u32 %v1164, %v1160
        %v1166 = vrot.slane %v1165, 4
        %v1168 = vshll.u32 %v833, 16
        %v1170 = vrot.slane %v1168, 5
        %v1171 = vsel %vm306, %v1166, %v1170
        %v1173 = vshrl.u32 %v784, 16
        %v1175 = vrot.slane %v1173, 4
        %v1176 = vshll.u32 %v784, 16
        %v1178 = vrot.slane %v1176, 5
        %v1179 = vor.u32 %v1175, %v1178
        %v1180 = vrot.slane %v1179, 4
        %v1182 = vshll.u32 %v785, 16
        %v1184 = vrot.slane %v1182, 5
        %v1185 = vsel %vm306, %v1180, %v1184
        %v1186 = vshrl.u32 %v785, 16
        %v1188 = vrot.slane %v1186, 4
        %v1189 = vor.u32 %v1188, %v1184
        %v1190 = vrot.slane %v1189, 4
        %v1192 = vshll.u32 %v834, 16
        %v1194 = vrot.slane %v1192, 5
        %v1195 = vsel %vm306, %v1190, %v1194
        %v1197 = vshrl.u32 %v786, 16
        %v1199 = vrot.slane %v1197, 4
        %v1200 = vshll.u32 %v786, 16
        %v1202 = vrot.slane %v1200, 5
        %v1203 = vor.u32 %v1199, %v1202
        %v1204 = vrot.slane %v1203, 4
        %v1206 = vshll.u32 %v787, 16
        %v1208 = vrot.slane %v1206, 5
        %v1209 = vsel %vm306, %v1204, %v1208
        %v1210 = vshrl.u32 %v787, 16
        %v1212 = vrot.slane %v1210, 4
        %v1213 = vor.u32 %v1212, %v1208
        %v1214 = vrot.slane %v1213, 4
        %v1216 = vshll.u32 %v835, 16
        %v1218 = vrot.slane %v1216, 5
        %v1219 = vsel %vm306, %v1214, %v1218
        %v1252 = vmax.bf16 %v788, %v849
        %v1253 = vmax.bf16 %v789, %v859
        %v1254 = vmax.bf16 %v790, %v873
        %v1255 = vmax.bf16 %v791, %v883
        %v1256 = vmax.bf16 %v792, %v897
        %v1257 = vmax.bf16 %v793, %v907
        %v1258 = vmax.bf16 %v794, %v921
        %v1259 = vmax.bf16 %v795, %v931
        %v1260 = vmax.bf16 %v796, %v945
        %v1261 = vmax.bf16 %v797, %v955
        %v1262 = vmax.bf16 %v798, %v969
        %v1263 = vmax.bf16 %v799, %v979
        %v1264 = vmax.bf16 %v800, %v993
        %v1265 = vmax.bf16 %v801, %v1003
        %v1266 = vmax.bf16 %v802, %v1017
        %v1267 = vmax.bf16 %v803, %v1027
        %v1268 = vmax.bf16 %v804, %v1041
        %v1269 = vmax.bf16 %v805, %v1051
        %v1270 = vmax.bf16 %v806, %v1065
        %v1271 = vmax.bf16 %v807, %v1075
        %v1272 = vmax.bf16 %v808, %v1089
        %v1273 = vmax.bf16 %v809, %v1099
        %v1274 = vmax.bf16 %v810, %v1113
        %v1275 = vmax.bf16 %v811, %v1123
        %v1276 = vmax.bf16 %v812, %v1137
        %v1277 = vmax.bf16 %v813, %v1147
        %v1278 = vmax.bf16 %v814, %v1161
        %v1279 = vmax.bf16 %v815, %v1171
        %v1280 = vmax.bf16 %v816, %v1185
        %v1281 = vmax.bf16 %v817, %v1195
        %v1282 = vmax.bf16 %v818, %v1209
        %v1283 = vmax.bf16 %v819, %v1219
        %v1284 = vld [vmem:[%s245] sm:$0xf]
        %v1285 = vld [vmem:[%s245 + $0x4] sm:$0xf]
        %v1286 = vld [vmem:[%s245 + $0xc] sm:$0xf]
        %v1287 = vld [vmem:[%s245 + $0x10] sm:$0xf]
        %v1288 = vld [vmem:[%s245 + $0x18] sm:$0xf]
        %v1289 = vld [vmem:[%s245 + $0x1c] sm:$0xf]
        %v1290 = vld [vmem:[%s245 + $0x24] sm:$0xf]
        %v1291 = vld [vmem:[%s245 + $0x28] sm:$0xf]
        %v1292 = vld [vmem:[%s245 + $0x30] sm:$0xf]
        %v1293 = vld [vmem:[%s245 + $0x34] sm:$0xf]
        %v1294 = vld [vmem:[%s245 + $0x3c] sm:$0xf]
        %v1295 = vld [vmem:[%s245 + $0x40] sm:$0xf]
        %v1296 = vld [vmem:[%s245 + $0x48] sm:$0xf]
        %v1297 = vld [vmem:[%s245 + $0x4c] sm:$0xf]
        %v1298 = vld [vmem:[%s245 + $0x54] sm:$0xf]
        %v1299 = vld [vmem:[%s245 + $0x58] sm:$0xf]
        %v1300 = vld [vmem:[%s245 + $0x60] sm:$0xf]
        %v1301 = vld [vmem:[%s245 + $0x64] sm:$0xf]
        %v1302 = vld [vmem:[%s245 + $0x6c] sm:$0xf]
        %v1303 = vld [vmem:[%s245 + $0x70] sm:$0xf]
        %v1304 = vld [vmem:[%s245 + $0x78] sm:$0xf]
        %v1305 = vld [vmem:[%s245 + $0x7c] sm:$0xf]
        %v1306 = vld [vmem:[%s245 + $0x84] sm:$0xf]
        %v1307 = vld [vmem:[%s245 + $0x88] sm:$0xf]
        %v1308 = vld [vmem:[%s245 + $0x90] sm:$0xf]
        %v1309 = vld [vmem:[%s245 + $0x94] sm:$0xf]
        %v1310 = vld [vmem:[%s245 + $0x9c] sm:$0xf]
        %v1311 = vld [vmem:[%s245 + $0xa0] sm:$0xf]
        %v1312 = vld [vmem:[%s245 + $0xa8] sm:$0xf]
        %v1313 = vld [vmem:[%s245 + $0xac] sm:$0xf]
        %v1314 = vld [vmem:[%s245 + $0xb4] sm:$0xf]
        %v1315 = vld [vmem:[%s245 + $0xb8] sm:$0xf]
        %v1316 = vmax.bf16 %v1252, %v1284
        %v1317 = vmax.bf16 %v1253, %v1285
        %v1318 = vmax.bf16 %v1254, %v1286
        %v1319 = vmax.bf16 %v1255, %v1287
        %v1320 = vmax.bf16 %v1256, %v1288
        %v1321 = vmax.bf16 %v1257, %v1289
        %v1322 = vmax.bf16 %v1258, %v1290
        %v1323 = vmax.bf16 %v1259, %v1291
        %v1324 = vmax.bf16 %v1260, %v1292
        %v1325 = vmax.bf16 %v1261, %v1293
        %v1326 = vmax.bf16 %v1262, %v1294
        %v1327 = vmax.bf16 %v1263, %v1295
        %v1328 = vmax.bf16 %v1264, %v1296
        %v1329 = vmax.bf16 %v1265, %v1297
        %v1330 = vmax.bf16 %v1266, %v1298
        %v1331 = vmax.bf16 %v1267, %v1299
        %v1332 = vmax.bf16 %v1268, %v1300
        %v1333 = vmax.bf16 %v1269, %v1301
        %v1334 = vmax.bf16 %v1270, %v1302
        %v1335 = vmax.bf16 %v1271, %v1303
        %v1336 = vmax.bf16 %v1272, %v1304
        %v1337 = vmax.bf16 %v1273, %v1305
        %v1338 = vmax.bf16 %v1274, %v1306
        %v1339 = vmax.bf16 %v1275, %v1307
        %v1340 = vmax.bf16 %v1276, %v1308
        %v1341 = vmax.bf16 %v1277, %v1309
        %v1342 = vmax.bf16 %v1278, %v1310
        %v1343 = vmax.bf16 %v1279, %v1311
        %v1344 = vmax.bf16 %v1280, %v1312
        %v1345 = vmax.bf16 %v1281, %v1313
        %v1346 = vmax.bf16 %v1282, %v1314
        %v1347 = vmax.bf16 %v1283, %v1315
        %s1348 = scalar_lea.vmem %s245, 12
        %v1349 = vld [vmem:[%s1348] sm:$0xf]
        %v1350 = vld [vmem:[%s1348 + $0x4] sm:$0xf]
        %v1351 = vld [vmem:[%s1348 + $0xc] sm:$0xf]
        %v1352 = vld [vmem:[%s1348 + $0x10] sm:$0xf]
        %v1353 = vld [vmem:[%s1348 + $0x18] sm:$0xf]
        %v1354 = vld [vmem:[%s1348 + $0x1c] sm:$0xf]
        %v1355 = vld [vmem:[%s1348 + $0x24] sm:$0xf]
        %v1356 = vld [vmem:[%s1348 + $0x28] sm:$0xf]
        %v1357 = vld [vmem:[%s1348 + $0x30] sm:$0xf]
        %v1358 = vld [vmem:[%s1348 + $0x34] sm:$0xf]
        %v1359 = vld [vmem:[%s1348 + $0x3c] sm:$0xf]
        %v1360 = vld [vmem:[%s1348 + $0x40] sm:$0xf]
        %v1361 = vld [vmem:[%s1348 + $0x48] sm:$0xf]
        %v1362 = vld [vmem:[%s1348 + $0x4c] sm:$0xf]
        %v1363 = vld [vmem:[%s1348 + $0x54] sm:$0xf]
        %v1364 = vld [vmem:[%s1348 + $0x58] sm:$0xf]
        %v1365 = vld [vmem:[%s1348 + $0x60] sm:$0xf]
        %v1366 = vld [vmem:[%s1348 + $0x64] sm:$0xf]
        %v1367 = vld [vmem:[%s1348 + $0x6c] sm:$0xf]
        %v1368 = vld [vmem:[%s1348 + $0x70] sm:$0xf]
        %v1369 = vld [vmem:[%s1348 + $0x78] sm:$0xf]
        %v1370 = vld [vmem:[%s1348 + $0x7c] sm:$0xf]
        %v1371 = vld [vmem:[%s1348 + $0x84] sm:$0xf]
        %v1372 = vld [vmem:[%s1348 + $0x88] sm:$0xf]
        %v1373 = vld [vmem:[%s1348 + $0x90] sm:$0xf]
        %v1374 = vld [vmem:[%s1348 + $0x94] sm:$0xf]
        %v1375 = vld [vmem:[%s1348 + $0x9c] sm:$0xf]
        %v1376 = vld [vmem:[%s1348 + $0xa0] sm:$0xf]
        %v1377 = vld [vmem:[%s1348 + $0xa8] sm:$0xf]
        %v1378 = vld [vmem:[%s1348 + $0xac] sm:$0xf]
        %v1379 = vld [vmem:[%s1348 + $0xb4] sm:$0xf]
        %v1380 = vld [vmem:[%s1348 + $0xb8] sm:$0xf]
        %v1381 = vmax.bf16 %v1316, %v1349
        %v1382 = vmax.bf16 %v1317, %v1350
        %v1383 = vmax.bf16 %v1318, %v1351
        %v1384 = vmax.bf16 %v1319, %v1352
        %v1385 = vmax.bf16 %v1320, %v1353
        %v1386 = vmax.bf16 %v1321, %v1354
        %v1387 = vmax.bf16 %v1322, %v1355
        %v1388 = vmax.bf16 %v1323, %v1356
        %v1389 = vmax.bf16 %v1324, %v1357
        %v1390 = vmax.bf16 %v1325, %v1358
        %v1391 = vmax.bf16 %v1326, %v1359
        %v1392 = vmax.bf16 %v1327, %v1360
        %v1393 = vmax.bf16 %v1328, %v1361
        %v1394 = vmax.bf16 %v1329, %v1362
        %v1395 = vmax.bf16 %v1330, %v1363
        %v1396 = vmax.bf16 %v1331, %v1364
        %v1397 = vmax.bf16 %v1332, %v1365
        %v1398 = vmax.bf16 %v1333, %v1366
        %v1399 = vmax.bf16 %v1334, %v1367
        %v1400 = vmax.bf16 %v1335, %v1368
        %v1401 = vmax.bf16 %v1336, %v1369
        %v1402 = vmax.bf16 %v1337, %v1370
        %v1403 = vmax.bf16 %v1338, %v1371
        %v1404 = vmax.bf16 %v1339, %v1372
        %v1405 = vmax.bf16 %v1340, %v1373
        %v1406 = vmax.bf16 %v1341, %v1374
        %v1407 = vmax.bf16 %v1342, %v1375
        %v1408 = vmax.bf16 %v1343, %v1376
        %v1409 = vmax.bf16 %v1344, %v1377
        %v1410 = vmax.bf16 %v1345, %v1378
        %v1411 = vmax.bf16 %v1346, %v1379
        %v1412 = vmax.bf16 %v1347, %v1380
        %v1413 = vld [vmem:[%s250] sm:$0xf]
        %v1414 = vld [vmem:[%s250 + $0x4] sm:$0xf]
        %v1415 = vld [vmem:[%s250 + $0xc] sm:$0xf]
        %v1416 = vld [vmem:[%s250 + $0x10] sm:$0xf]
        %v1417 = vld [vmem:[%s250 + $0x18] sm:$0xf]
        %v1418 = vld [vmem:[%s250 + $0x1c] sm:$0xf]
        %v1419 = vld [vmem:[%s250 + $0x24] sm:$0xf]
        %v1420 = vld [vmem:[%s250 + $0x28] sm:$0xf]
        %v1421 = vld [vmem:[%s250 + $0x30] sm:$0xf]
        %v1422 = vld [vmem:[%s250 + $0x34] sm:$0xf]
        %v1423 = vld [vmem:[%s250 + $0x3c] sm:$0xf]
        %v1424 = vld [vmem:[%s250 + $0x40] sm:$0xf]
        %v1425 = vld [vmem:[%s250 + $0x48] sm:$0xf]
        %v1426 = vld [vmem:[%s250 + $0x4c] sm:$0xf]
        %v1427 = vld [vmem:[%s250 + $0x54] sm:$0xf]
        %v1428 = vld [vmem:[%s250 + $0x58] sm:$0xf]
        %v1429 = vld [vmem:[%s250 + $0x60] sm:$0xf]
        %v1430 = vld [vmem:[%s250 + $0x64] sm:$0xf]
        %v1431 = vld [vmem:[%s250 + $0x6c] sm:$0xf]
        %v1432 = vld [vmem:[%s250 + $0x70] sm:$0xf]
        %v1433 = vld [vmem:[%s250 + $0x78] sm:$0xf]
        %v1434 = vld [vmem:[%s250 + $0x7c] sm:$0xf]
        %v1435 = vld [vmem:[%s250 + $0x84] sm:$0xf]
        %v1436 = vld [vmem:[%s250 + $0x88] sm:$0xf]
        %v1437 = vld [vmem:[%s250 + $0x90] sm:$0xf]
        %v1438 = vld [vmem:[%s250 + $0x94] sm:$0xf]
        %v1439 = vld [vmem:[%s250 + $0x9c] sm:$0xf]
        %v1440 = vld [vmem:[%s250 + $0xa0] sm:$0xf]
        %v1441 = vld [vmem:[%s250 + $0xa8] sm:$0xf]
        %v1442 = vld [vmem:[%s250 + $0xac] sm:$0xf]
        %v1443 = vld [vmem:[%s250 + $0xb4] sm:$0xf]
        %v1444 = vld [vmem:[%s250 + $0xb8] sm:$0xf]
        %v1445 = vmax.bf16 %v1381, %v1413
        %v1446 = vmax.bf16 %v1382, %v1414
        %v1447 = vmax.bf16 %v1383, %v1415
        %v1448 = vmax.bf16 %v1384, %v1416
        %v1449 = vmax.bf16 %v1385, %v1417
        %v1450 = vmax.bf16 %v1386, %v1418
        %v1451 = vmax.bf16 %v1387, %v1419
        %v1452 = vmax.bf16 %v1388, %v1420
        %v1453 = vmax.bf16 %v1389, %v1421
        %v1454 = vmax.bf16 %v1390, %v1422
        %v1455 = vmax.bf16 %v1391, %v1423
        %v1456 = vmax.bf16 %v1392, %v1424
        %v1457 = vmax.bf16 %v1393, %v1425
        %v1458 = vmax.bf16 %v1394, %v1426
        %v1459 = vmax.bf16 %v1395, %v1427
        %v1460 = vmax.bf16 %v1396, %v1428
        %v1461 = vmax.bf16 %v1397, %v1429
        %v1462 = vmax.bf16 %v1398, %v1430
        %v1463 = vmax.bf16 %v1399, %v1431
        %v1464 = vmax.bf16 %v1400, %v1432
        %v1465 = vmax.bf16 %v1401, %v1433
        %v1466 = vmax.bf16 %v1402, %v1434
        %v1467 = vmax.bf16 %v1403, %v1435
        %v1468 = vmax.bf16 %v1404, %v1436
        %v1469 = vmax.bf16 %v1405, %v1437
        %v1470 = vmax.bf16 %v1406, %v1438
        %v1471 = vmax.bf16 %v1407, %v1439
        %v1472 = vmax.bf16 %v1408, %v1440
        %v1473 = vmax.bf16 %v1409, %v1441
        %v1474 = vmax.bf16 %v1410, %v1442
        %v1475 = vmax.bf16 %v1411, %v1443
        %v1476 = vmax.bf16 %v1412, %v1444
        %v1477 = vld [vmem:[%s250 + $0x8] sm:$0x1]
        %v1478 = vld [vmem:[%s250 + $0x14] sm:$0x1]
        %v1479 = vld [vmem:[%s250 + $0x20] sm:$0x1]
        %v1480 = vld [vmem:[%s250 + $0x2c] sm:$0x1]
        %v1481 = vld [vmem:[%s250 + $0x38] sm:$0x1]
        %v1482 = vld [vmem:[%s250 + $0x44] sm:$0x1]
        %v1483 = vld [vmem:[%s250 + $0x50] sm:$0x1]
        %v1484 = vld [vmem:[%s250 + $0x5c] sm:$0x1]
        %v1485 = vld [vmem:[%s250 + $0x68] sm:$0x1]
        %v1486 = vld [vmem:[%s250 + $0x74] sm:$0x1]
        %v1487 = vld [vmem:[%s250 + $0x80] sm:$0x1]
        %v1488 = vld [vmem:[%s250 + $0x8c] sm:$0x1]
        %v1489 = vld [vmem:[%s250 + $0x98] sm:$0x1]
        %v1490 = vld [vmem:[%s250 + $0xa4] sm:$0x1]
        %v1491 = vld [vmem:[%s250 + $0xb0] sm:$0x1]
        %v1492 = vld [vmem:[%s250 + $0xbc] sm:$0x1]
        %v1494 = vshrl.u32 %v1413, 16
        %v1496 = vrot.slane %v1494, 4
        %v1497 = vshll.u32 %v1413, 16
        %v1499 = vrot.slane %v1497, 5
        %v1500 = vor.u32 %v1496, %v1499
        %v1501 = vrot.slane %v1500, 4
        %v1503 = vshll.u32 %v1414, 16
        %v1505 = vrot.slane %v1503, 5
        %v1506 = vsel %vm306, %v1501, %v1505
        %v1507 = vshrl.u32 %v1414, 16
        %v1509 = vrot.slane %v1507, 4
        %v1510 = vor.u32 %v1509, %v1505
        %v1511 = vrot.slane %v1510, 4
        %v1513 = vshll.u32 %v1477, 16
        %v1515 = vrot.slane %v1513, 5
        %v1516 = vsel %vm306, %v1511, %v1515
        %v1518 = vshrl.u32 %v1415, 16
        %v1520 = vrot.slane %v1518, 4
        %v1521 = vshll.u32 %v1415, 16
        %v1523 = vrot.slane %v1521, 5
        %v1524 = vor.u32 %v1520, %v1523
        %v1525 = vrot.slane %v1524, 4
        %v1527 = vshll.u32 %v1416, 16
        %v1529 = vrot.slane %v1527, 5
        %v1530 = vsel %vm306, %v1525, %v1529
        %v1531 = vshrl.u32 %v1416, 16
        %v1533 = vrot.slane %v1531, 4
        %v1534 = vor.u32 %v1533, %v1529
        %v1535 = vrot.slane %v1534, 4
        %v1537 = vshll.u32 %v1478, 16
        %v1539 = vrot.slane %v1537, 5
        %v1540 = vsel %vm306, %v1535, %v1539
        %v1542 = vshrl.u32 %v1417, 16
        %v1544 = vrot.slane %v1542, 4
        %v1545 = vshll.u32 %v1417, 16
        %v1547 = vrot.slane %v1545, 5
        %v1548 = vor.u32 %v1544, %v1547
        %v1549 = vrot.slane %v1548, 4
        %v1551 = vshll.u32 %v1418, 16
        %v1553 = vrot.slane %v1551, 5
        %v1554 = vsel %vm306, %v1549, %v1553
        %v1555 = vshrl.u32 %v1418, 16
        %v1557 = vrot.slane %v1555, 4
        %v1558 = vor.u32 %v1557, %v1553
        %v1559 = vrot.slane %v1558, 4
        %v1561 = vshll.u32 %v1479, 16
        %v1563 = vrot.slane %v1561, 5
        %v1564 = vsel %vm306, %v1559, %v1563
        %v1566 = vshrl.u32 %v1419, 16
        %v1568 = vrot.slane %v1566, 4
        %v1569 = vshll.u32 %v1419, 16
        %v1571 = vrot.slane %v1569, 5
        %v1572 = vor.u32 %v1568, %v1571
        %v1573 = vrot.slane %v1572, 4
        %v1575 = vshll.u32 %v1420, 16
        %v1577 = vrot.slane %v1575, 5
        %v1578 = vsel %vm306, %v1573, %v1577
        %v1579 = vshrl.u32 %v1420, 16
        %v1581 = vrot.slane %v1579, 4
        %v1582 = vor.u32 %v1581, %v1577
        %v1583 = vrot.slane %v1582, 4
        %v1585 = vshll.u32 %v1480, 16
        %v1587 = vrot.slane %v1585, 5
        %v1588 = vsel %vm306, %v1583, %v1587
        %v1590 = vshrl.u32 %v1421, 16
        %v1592 = vrot.slane %v1590, 4
        %v1593 = vshll.u32 %v1421, 16
        %v1595 = vrot.slane %v1593, 5
        %v1596 = vor.u32 %v1592, %v1595
        %v1597 = vrot.slane %v1596, 4
        %v1599 = vshll.u32 %v1422, 16
        %v1601 = vrot.slane %v1599, 5
        %v1602 = vsel %vm306, %v1597, %v1601
        %v1603 = vshrl.u32 %v1422, 16
        %v1605 = vrot.slane %v1603, 4
        %v1606 = vor.u32 %v1605, %v1601
        %v1607 = vrot.slane %v1606, 4
        %v1609 = vshll.u32 %v1481, 16
        %v1611 = vrot.slane %v1609, 5
        %v1612 = vsel %vm306, %v1607, %v1611
        %v1614 = vshrl.u32 %v1423, 16
        %v1616 = vrot.slane %v1614, 4
        %v1617 = vshll.u32 %v1423, 16
        %v1619 = vrot.slane %v1617, 5
        %v1620 = vor.u32 %v1616, %v1619
        %v1621 = vrot.slane %v1620, 4
        %v1623 = vshll.u32 %v1424, 16
        %v1625 = vrot.slane %v1623, 5
        %v1626 = vsel %vm306, %v1621, %v1625
        %v1627 = vshrl.u32 %v1424, 16
        %v1629 = vrot.slane %v1627, 4
        %v1630 = vor.u32 %v1629, %v1625
        %v1631 = vrot.slane %v1630, 4
        %v1633 = vshll.u32 %v1482, 16
        %v1635 = vrot.slane %v1633, 5
        %v1636 = vsel %vm306, %v1631, %v1635
        %v1638 = vshrl.u32 %v1425, 16
        %v1640 = vrot.slane %v1638, 4
        %v1641 = vshll.u32 %v1425, 16
        %v1643 = vrot.slane %v1641, 5
        %v1644 = vor.u32 %v1640, %v1643
        %v1645 = vrot.slane %v1644, 4
        %v1647 = vshll.u32 %v1426, 16
        %v1649 = vrot.slane %v1647, 5
        %v1650 = vsel %vm306, %v1645, %v1649
        %v1651 = vshrl.u32 %v1426, 16
        %v1653 = vrot.slane %v1651, 4
        %v1654 = vor.u32 %v1653, %v1649
        %v1655 = vrot.slane %v1654, 4
        %v1657 = vshll.u32 %v1483, 16
        %v1659 = vrot.slane %v1657, 5
        %v1660 = vsel %vm306, %v1655, %v1659
        %v1662 = vshrl.u32 %v1427, 16
        %v1664 = vrot.slane %v1662, 4
        %v1665 = vshll.u32 %v1427, 16
        %v1667 = vrot.slane %v1665, 5
        %v1668 = vor.u32 %v1664, %v1667
        %v1669 = vrot.slane %v1668, 4
        %v1671 = vshll.u32 %v1428, 16
        %v1673 = vrot.slane %v1671, 5
        %v1674 = vsel %vm306, %v1669, %v1673
        %v1675 = vshrl.u32 %v1428, 16
        %v1677 = vrot.slane %v1675, 4
        %v1678 = vor.u32 %v1677, %v1673
        %v1679 = vrot.slane %v1678, 4
        %v1681 = vshll.u32 %v1484, 16
        %v1683 = vrot.slane %v1681, 5
        %v1684 = vsel %vm306, %v1679, %v1683
        %v1686 = vshrl.u32 %v1429, 16
        %v1688 = vrot.slane %v1686, 4
        %v1689 = vshll.u32 %v1429, 16
        %v1691 = vrot.slane %v1689, 5
        %v1692 = vor.u32 %v1688, %v1691
        %v1693 = vrot.slane %v1692, 4
        %v1695 = vshll.u32 %v1430, 16
        %v1697 = vrot.slane %v1695, 5
        %v1698 = vsel %vm306, %v1693, %v1697
        %v1699 = vshrl.u32 %v1430, 16
        %v1701 = vrot.slane %v1699, 4
        %v1702 = vor.u32 %v1701, %v1697
        %v1703 = vrot.slane %v1702, 4
        %v1705 = vshll.u32 %v1485, 16
        %v1707 = vrot.slane %v1705, 5
        %v1708 = vsel %vm306, %v1703, %v1707
        %v1710 = vshrl.u32 %v1431, 16
        %v1712 = vrot.slane %v1710, 4
        %v1713 = vshll.u32 %v1431, 16
        %v1715 = vrot.slane %v1713, 5
        %v1716 = vor.u32 %v1712, %v1715
        %v1717 = vrot.slane %v1716, 4
        %v1719 = vshll.u32 %v1432, 16
        %v1721 = vrot.slane %v1719, 5
        %v1722 = vsel %vm306, %v1717, %v1721
        %v1723 = vshrl.u32 %v1432, 16
        %v1725 = vrot.slane %v1723, 4
        %v1726 = vor.u32 %v1725, %v1721
        %v1727 = vrot.slane %v1726, 4
        %v1729 = vshll.u32 %v1486, 16
        %v1731 = vrot.slane %v1729, 5
        %v1732 = vsel %vm306, %v1727, %v1731
        %v1734 = vshrl.u32 %v1433, 16
        %v1736 = vrot.slane %v1734, 4
        %v1737 = vshll.u32 %v1433, 16
        %v1739 = vrot.slane %v1737, 5
        %v1740 = vor.u32 %v1736, %v1739
        %v1741 = vrot.slane %v1740, 4
        %v1743 = vshll.u32 %v1434, 16
        %v1745 = vrot.slane %v1743, 5
        %v1746 = vsel %vm306, %v1741, %v1745
        %v1747 = vshrl.u32 %v1434, 16
        %v1749 = vrot.slane %v1747, 4
        %v1750 = vor.u32 %v1749, %v1745
        %v1751 = vrot.slane %v1750, 4
        %v1753 = vshll.u32 %v1487, 16
        %v1755 = vrot.slane %v1753, 5
        %v1756 = vsel %vm306, %v1751, %v1755
        %v1758 = vshrl.u32 %v1435, 16
        %v1760 = vrot.slane %v1758, 4
        %v1761 = vshll.u32 %v1435, 16
        %v1763 = vrot.slane %v1761, 5
        %v1764 = vor.u32 %v1760, %v1763
        %v1765 = vrot.slane %v1764, 4
        %v1767 = vshll.u32 %v1436, 16
        %v1769 = vrot.slane %v1767, 5
        %v1770 = vsel %vm306, %v1765, %v1769
        %v1771 = vshrl.u32 %v1436, 16
        %v1773 = vrot.slane %v1771, 4
        %v1774 = vor.u32 %v1773, %v1769
        %v1775 = vrot.slane %v1774, 4
        %v1777 = vshll.u32 %v1488, 16
        %v1779 = vrot.slane %v1777, 5
        %v1780 = vsel %vm306, %v1775, %v1779
        %v1782 = vshrl.u32 %v1437, 16
        %v1784 = vrot.slane %v1782, 4
        %v1785 = vshll.u32 %v1437, 16
        %v1787 = vrot.slane %v1785, 5
        %v1788 = vor.u32 %v1784, %v1787
        %v1789 = vrot.slane %v1788, 4
        %v1791 = vshll.u32 %v1438, 16
        %v1793 = vrot.slane %v1791, 5
        %v1794 = vsel %vm306, %v1789, %v1793
        %v1795 = vshrl.u32 %v1438, 16
        %v1797 = vrot.slane %v1795, 4
        %v1798 = vor.u32 %v1797, %v1793
        %v1799 = vrot.slane %v1798, 4
        %v1801 = vshll.u32 %v1489, 16
        %v1803 = vrot.slane %v1801, 5
        %v1804 = vsel %vm306, %v1799, %v1803
        %v1806 = vshrl.u32 %v1439, 16
        %v1808 = vrot.slane %v1806, 4
        %v1809 = vshll.u32 %v1439, 16
        %v1811 = vrot.slane %v1809, 5
        %v1812 = vor.u32 %v1808, %v1811
        %v1813 = vrot.slane %v1812, 4
        %v1815 = vshll.u32 %v1440, 16
        %v1817 = vrot.slane %v1815, 5
        %v1818 = vsel %vm306, %v1813, %v1817
        %v1819 = vshrl.u32 %v1440, 16
        %v1821 = vrot.slane %v1819, 4
        %v1822 = vor.u32 %v1821, %v1817
        %v1823 = vrot.slane %v1822, 4
        %v1825 = vshll.u32 %v1490, 16
        %v1827 = vrot.slane %v1825, 5
        %v1828 = vsel %vm306, %v1823, %v1827
        %v1830 = vshrl.u32 %v1441, 16
        %v1832 = vrot.slane %v1830, 4
        %v1833 = vshll.u32 %v1441, 16
        %v1835 = vrot.slane %v1833, 5
        %v1836 = vor.u32 %v1832, %v1835
        %v1837 = vrot.slane %v1836, 4
        %v1839 = vshll.u32 %v1442, 16
        %v1841 = vrot.slane %v1839, 5
        %v1842 = vsel %vm306, %v1837, %v1841
        %v1843 = vshrl.u32 %v1442, 16
        %v1845 = vrot.slane %v1843, 4
        %v1846 = vor.u32 %v1845, %v1841
        %v1847 = vrot.slane %v1846, 4
        %v1849 = vshll.u32 %v1491, 16
        %v1851 = vrot.slane %v1849, 5
        %v1852 = vsel %vm306, %v1847, %v1851
        %v1854 = vshrl.u32 %v1443, 16
        %v1856 = vrot.slane %v1854, 4
        %v1857 = vshll.u32 %v1443, 16
        %v1859 = vrot.slane %v1857, 5
        %v1860 = vor.u32 %v1856, %v1859
        %v1861 = vrot.slane %v1860, 4
        %v1863 = vshll.u32 %v1444, 16
        %v1865 = vrot.slane %v1863, 5
        %v1866 = vsel %vm306, %v1861, %v1865
        %v1867 = vshrl.u32 %v1444, 16
        %v1869 = vrot.slane %v1867, 4
        %v1870 = vor.u32 %v1869, %v1865
        %v1871 = vrot.slane %v1870, 4
        %v1873 = vshll.u32 %v1492, 16
        %v1875 = vrot.slane %v1873, 5
        %v1876 = vsel %vm306, %v1871, %v1875
        %v1909 = vmax.bf16 %v1445, %v1506
        %v1910 = vmax.bf16 %v1446, %v1516
        %v1911 = vmax.bf16 %v1447, %v1530
        %v1912 = vmax.bf16 %v1448, %v1540
        %v1913 = vmax.bf16 %v1449, %v1554
        %v1914 = vmax.bf16 %v1450, %v1564
        %v1915 = vmax.bf16 %v1451, %v1578
        %v1916 = vmax.bf16 %v1452, %v1588
        %v1917 = vmax.bf16 %v1453, %v1602
        %v1918 = vmax.bf16 %v1454, %v1612
        %v1919 = vmax.bf16 %v1455, %v1626
        %v1920 = vmax.bf16 %v1456, %v1636
        %v1921 = vmax.bf16 %v1457, %v1650
        %v1922 = vmax.bf16 %v1458, %v1660
        %v1923 = vmax.bf16 %v1459, %v1674
        %v1924 = vmax.bf16 %v1460, %v1684
        %v1925 = vmax.bf16 %v1461, %v1698
        %v1926 = vmax.bf16 %v1462, %v1708
        %v1927 = vmax.bf16 %v1463, %v1722
        %v1928 = vmax.bf16 %v1464, %v1732
        %v1929 = vmax.bf16 %v1465, %v1746
        %v1930 = vmax.bf16 %v1466, %v1756
        %v1931 = vmax.bf16 %v1467, %v1770
        %v1932 = vmax.bf16 %v1468, %v1780
        %v1933 = vmax.bf16 %v1469, %v1794
        %v1934 = vmax.bf16 %v1470, %v1804
        %v1935 = vmax.bf16 %v1471, %v1818
        %v1936 = vmax.bf16 %v1472, %v1828
        %v1937 = vmax.bf16 %v1473, %v1842
        %v1938 = vmax.bf16 %v1474, %v1852
        %v1939 = vmax.bf16 %v1475, %v1866
        %v1940 = vmax.bf16 %v1476, %v1876
        %v1941 = vld [vmem:[%s255] sm:$0xf]
        %v1942 = vld [vmem:[%s255 + $0x4] sm:$0xf]
        %v1943 = vld [vmem:[%s255 + $0xc] sm:$0xf]
        %v1944 = vld [vmem:[%s255 + $0x10] sm:$0xf]
        %v1945 = vld [vmem:[%s255 + $0x18] sm:$0xf]
        %v1946 = vld [vmem:[%s255 + $0x1c] sm:$0xf]
        %v1947 = vld [vmem:[%s255 + $0x24] sm:$0xf]
        %v1948 = vld [vmem:[%s255 + $0x28] sm:$0xf]
        %v1949 = vld [vmem:[%s255 + $0x30] sm:$0xf]
        %v1950 = vld [vmem:[%s255 + $0x34] sm:$0xf]
        %v1951 = vld [vmem:[%s255 + $0x3c] sm:$0xf]
        %v1952 = vld [vmem:[%s255 + $0x40] sm:$0xf]
        %v1953 = vld [vmem:[%s255 + $0x48] sm:$0xf]
        %v1954 = vld [vmem:[%s255 + $0x4c] sm:$0xf]
        %v1955 = vld [vmem:[%s255 + $0x54] sm:$0xf]
        %v1956 = vld [vmem:[%s255 + $0x58] sm:$0xf]
        %v1957 = vld [vmem:[%s255 + $0x60] sm:$0xf]
        %v1958 = vld [vmem:[%s255 + $0x64] sm:$0xf]
        %v1959 = vld [vmem:[%s255 + $0x6c] sm:$0xf]
        %v1960 = vld [vmem:[%s255 + $0x70] sm:$0xf]
        %v1961 = vld [vmem:[%s255 + $0x78] sm:$0xf]
        %v1962 = vld [vmem:[%s255 + $0x7c] sm:$0xf]
        %v1963 = vld [vmem:[%s255 + $0x84] sm:$0xf]
        %v1964 = vld [vmem:[%s255 + $0x88] sm:$0xf]
        %v1965 = vld [vmem:[%s255 + $0x90] sm:$0xf]
        %v1966 = vld [vmem:[%s255 + $0x94] sm:$0xf]
        %v1967 = vld [vmem:[%s255 + $0x9c] sm:$0xf]
        %v1968 = vld [vmem:[%s255 + $0xa0] sm:$0xf]
        %v1969 = vld [vmem:[%s255 + $0xa8] sm:$0xf]
        %v1970 = vld [vmem:[%s255 + $0xac] sm:$0xf]
        %v1971 = vld [vmem:[%s255 + $0xb4] sm:$0xf]
        %v1972 = vld [vmem:[%s255 + $0xb8] sm:$0xf]
        %v1973 = vmax.bf16 %v1909, %v1941
        %v1974 = vmax.bf16 %v1910, %v1942
        %v1975 = vmax.bf16 %v1911, %v1943
        %v1976 = vmax.bf16 %v1912, %v1944
        %v1977 = vmax.bf16 %v1913, %v1945
        %v1978 = vmax.bf16 %v1914, %v1946
        %v1979 = vmax.bf16 %v1915, %v1947
        %v1980 = vmax.bf16 %v1916, %v1948
        %v1981 = vmax.bf16 %v1917, %v1949
        %v1982 = vmax.bf16 %v1918, %v1950
        %v1983 = vmax.bf16 %v1919, %v1951
        %v1984 = vmax.bf16 %v1920, %v1952
        %v1985 = vmax.bf16 %v1921, %v1953
        %v1986 = vmax.bf16 %v1922, %v1954
        %v1987 = vmax.bf16 %v1923, %v1955
        %v1988 = vmax.bf16 %v1924, %v1956
        %v1989 = vmax.bf16 %v1925, %v1957
        %v1990 = vmax.bf16 %v1926, %v1958
        %v1991 = vmax.bf16 %v1927, %v1959
        %v1992 = vmax.bf16 %v1928, %v1960
        %v1993 = vmax.bf16 %v1929, %v1961
        %v1994 = vmax.bf16 %v1930, %v1962
        %v1995 = vmax.bf16 %v1931, %v1963
        %v1996 = vmax.bf16 %v1932, %v1964
        %v1997 = vmax.bf16 %v1933, %v1965
        %v1998 = vmax.bf16 %v1934, %v1966
        %v1999 = vmax.bf16 %v1935, %v1967
        %v2000 = vmax.bf16 %v1936, %v1968
        %v2001 = vmax.bf16 %v1937, %v1969
        %v2002 = vmax.bf16 %v1938, %v1970
        %v2003 = vmax.bf16 %v1939, %v1971
        %v2004 = vmax.bf16 %v1940, %v1972
        %vm2005 = vcmask 519168
        %2006 = vst.msk [vmem:[%s235] sm:$0xf] %vm2005, %v1973
        %2007 = vst.msk [vmem:[%s235 + $0x4] sm:$0xf] %vm2005, %v1974
        %2008 = vst.msk [vmem:[%s235 + $0x8] sm:$0xf] %vm2005, %v1975
        %2009 = vst.msk [vmem:[%s235 + $0xc] sm:$0xf] %vm2005, %v1976
        %2010 = vst.msk [vmem:[%s235 + $0x10] sm:$0xf] %vm2005, %v1977
        %2011 = vst.msk [vmem:[%s235 + $0x14] sm:$0xf] %vm2005, %v1978
        %2012 = vst.msk [vmem:[%s235 + $0x18] sm:$0xf] %vm2005, %v1979
        %2013 = vst.msk [vmem:[%s235 + $0x1c] sm:$0xf] %vm2005, %v1980
        %2014 = vst.msk [vmem:[%s235 + $0x20] sm:$0xf] %vm2005, %v1981
        %2015 = vst.msk [vmem:[%s235 + $0x24] sm:$0xf] %vm2005, %v1982
        %2016 = vst.msk [vmem:[%s235 + $0x28] sm:$0xf] %vm2005, %v1983
        %2017 = vst.msk [vmem:[%s235 + $0x2c] sm:$0xf] %vm2005, %v1984
        %2018 = vst.msk [vmem:[%s235 + $0x30] sm:$0xf] %vm2005, %v1985
        %2019 = vst.msk [vmem:[%s235 + $0x34] sm:$0xf] %vm2005, %v1986
        %2020 = vst.msk [vmem:[%s235 + $0x38] sm:$0xf] %vm2005, %v1987
        %2021 = vst.msk [vmem:[%s235 + $0x3c] sm:$0xf] %vm2005, %v1988
        %2022 = vst.msk [vmem:[%s235 + $0x40] sm:$0xf] %vm2005, %v1989
        %2023 = vst.msk [vmem:[%s235 + $0x44] sm:$0xf] %vm2005, %v1990
        %2024 = vst.msk [vmem:[%s235 + $0x48] sm:$0xf] %vm2005, %v1991
        %2025 = vst.msk [vmem:[%s235 + $0x4c] sm:$0xf] %vm2005, %v1992
        %2026 = vst.msk [vmem:[%s235 + $0x50] sm:$0xf] %vm2005, %v1993
        %2027 = vst.msk [vmem:[%s235 + $0x54] sm:$0xf] %vm2005, %v1994
        %2028 = vst.msk [vmem:[%s235 + $0x58] sm:$0xf] %vm2005, %v1995
        %2029 = vst.msk [vmem:[%s235 + $0x5c] sm:$0xf] %vm2005, %v1996
        %2030 = vst.msk [vmem:[%s235 + $0x60] sm:$0xf] %vm2005, %v1997
        %2031 = vst.msk [vmem:[%s235 + $0x64] sm:$0xf] %vm2005, %v1998
        %2032 = vst.msk [vmem:[%s235 + $0x68] sm:$0xf] %vm2005, %v1999
        %2033 = vst.msk [vmem:[%s235 + $0x6c] sm:$0xf] %vm2005, %v2000
        %2034 = vst.msk [vmem:[%s235 + $0x70] sm:$0xf] %vm2005, %v2001
        %2035 = vst.msk [vmem:[%s235 + $0x74] sm:$0xf] %vm2005, %v2002
        %2036 = vst.msk [vmem:[%s235 + $0x78] sm:$0xf] %vm2005, %v2003
        %2037 = vst.msk [vmem:[%s235 + $0x7c] sm:$0xf] %vm2005, %v2004
        %s2038 = sand.u32 %s130, 1
        %s2039 = scalar_lea.sflag [#allocation3], %s2038
        %s2040 = sand.u32 %s130, 1
        %s2041 = smul.addr %s2040, 128
        %s2042 = scalar_lea.vmem [#allocation2], %s2041
        // Predicated region
        $region37: #{_stem_impl.3} parent=35 // pred_check
          %p2043 = pneg %p140
        $region38: #{_stem_impl.3} parent=35 // pred_check_branch
          %2045 = sbr.rel (%p2043) target = $region40
        $region39: #{_stem_impl.3} parent=35 // pred_region
          %s2047 = ssub.s32 2048, 2048
          %2048 = vsyncadd %s2039, %s2047
          %s2049 = smul.addr %s18, 32
          %s2050 = smul.addr %s2049, 64
          %s2051 = scalar_lea.hbm %s4, %s2050
          %s2052 = sshll.u32 %s2042, 4
          %s2053 = int_to_ptr.vmem [resolvable:$true] %s2052
          %2058 = dma.vmem_to_hbm [thread:$0]  %s2053, 2048, %s2051, %s2039, 64, 64, 4
        $region40: #{_stem_impl.3} parent=35 // pred_fallthru
          _
      $region36: #{_stem_impl.3} parent=5 // pred_fallthru
        _
      %p2059 = scmp.le.s32.totalorder 2, %s13
      // Predicated region
      $region41: #{_stem_impl.3} parent=5 // pred_check
        %p2060 = pneg %p2059
      $region42: #{_stem_impl.3} parent=5 // pred_check_branch
        %2062 = sbr.rel (%p2060) target = $region44
      $region43: #{_stem_impl.3} parent=5 // pred_region
        %s2063 = ssub.s32 %s13, 2
        // Predicated region
        $region45: #{_stem_impl.3} parent=43 // pred_check
          %p2064 = pneg %p146
        $region46: #{_stem_impl.3} parent=43 // pred_check_branch
          %2066 = sbr.rel (%p2064) target = $region48
        $region47: #{_stem_impl.3} parent=43 // pred_region
          %s2067 = sand.u32 %s131, 1
          %s2068 = scalar_lea.sflag [#allocation3], %s2067
          %s2069 = sand.u32 %s131, 1
          %s2070 = smul.addr %s2069, 128
          %s2071 = scalar_lea.vmem [#allocation2], %s2070
          %2072 = dma.done %s2068, 2048
        $region48: #{_stem_impl.3} parent=43 // pred_fallthru
          _
      $region44: #{_stem_impl.3} parent=5 // pred_fallthru
        _
    $region6: #{_stem_impl.3} parent=1 // loop_footer
      %s17 = sadd.s32 1, %s13
    $region7: #{_stem_impl.3} parent=1 // loop_footer_branch
      %12 = sbr.rel target = $region3
    $region8: #{_stem_impl.3} parent=1 // loop_exit
      _
    %2073 = vsyncpa [#allocation3], 1
    %s2074 = scalar_lea.sflag [#allocation3], 1
    %2075 = vsyncpa %s2074, 1

</llo_original>
